<compile_context>
chip_gen: v5e
topology: v5e:2x2
jax: 0.10.0
libtpu: 0.0.40
codegen_flags: <defaults>
</compile_context>

<pallas_src>
import math

import jax
import jax.numpy as jnp
from jax.experimental import pallas as pl
from jax.experimental.pallas import tpu as pltpu


def make_mha_kernel(num_heads, head_dim, batch_block, seq_len, embed_dim):
    H, D, BB, S, E = num_heads, head_dim, batch_block, seq_len, embed_dim
    R = BB * S  # rows per grid step

    def mha_kernel(x_ref, wqkv_ref, wo_ref, bqkv_ref, bo_ref, o_ref):
        # x_ref: (R, E) f32 rows for this batch block; cast to bf16 for the MXU.
        x_bf = x_ref[...].astype(jnp.bfloat16)

        # Fused Q/K/V projection: one (R, E) @ (E, 3E) bf16 MXU pass, f32 acc.
        # The 1/sqrt(D) scaling is folded into the Q slice of wqkv / bqkv.
        qkv = jnp.dot(x_bf, wqkv_ref[...],
                      preferred_element_type=jnp.float32) + bqkv_ref[...]

        # One-time relayout per block to head-major (BB*H, S, D); all
        # subsequent per-head work is lane-aligned batched matmuls (no
        # per-head sub-128-lane slicing in the hot loop).
        def to_heads(z):
            z = z.reshape(BB, S, H, D)
            z = jnp.transpose(z, (0, 2, 1, 3))          # (BB, H, S, D)
            return z.reshape(BB * H, S, D)

        q = to_heads(qkv[:, :E]).astype(jnp.bfloat16)         # pre-scaled
        k = to_heads(qkv[:, E:2 * E]).astype(jnp.bfloat16)
        v = to_heads(qkv[:, 2 * E:]).astype(jnp.bfloat16)

        # Head-batched QK^T: (BB*H, S, S) in f32 (MXU consumes bf16 operands).
        scores = jnp.einsum("bqd,bkd->bqk", q, k,
                            preferred_element_type=jnp.float32)

        # Softmax entirely in f32 on the VPU/EUP (exact normalization).
        scores = scores - jnp.max(scores, axis=-1, keepdims=True)
        p = jnp.exp(scores)
        p = p / jnp.sum(p, axis=-1, keepdims=True)

        # Head-batched PV: (BB*H, S, D) f32.
        ctx = jnp.einsum("bqk,bkd->bqd", p.astype(jnp.bfloat16), v,
                         preferred_element_type=jnp.float32)

        # One relayout back to row-major (R, E), then a single (R,E)@(E,E)
        # output projection (much friendlier to the MXU than H narrow
        # (R,D)@(D,E) matmuls with D << 128).
        ctx = ctx.reshape(BB, H, S, D)
        ctx = jnp.transpose(ctx, (0, 2, 1, 3)).reshape(R, E)
        out = jnp.dot(ctx.astype(jnp.bfloat16), wo_ref[...],
                      preferred_element_type=jnp.float32) + bo_ref[...]
        o_ref[...] = out.astype(o_ref.dtype)

    return mha_kernel


def _vmem_budget_bytes(bb, seq_len, embed_dim, num_heads):
    """Rough per-grid-step VMEM budget (double-buffered I/O + live values)."""
    R, E, H, S = bb * seq_len, embed_dim, num_heads, seq_len
    f32, bf16 = 4, 2
    io = 2 * (R * E * f32) + 2 * (R * E * f32)               # x block + out block
    w = 2 * ((E * 3 * E + E * E) * bf16 + 4 * E * f32)       # weights + biases
    live = (R * 3 * E) * f32                                 # qkv (f32)
    live += 3 * (R * E) * bf16                               # head-major q/k/v
    live += 2 * (bb * H * S * S) * f32                       # scores + probs
    live += 2 * (R * E) * f32                                # ctx + projected out
    return int(1.5 * (io + w + live)) + (1 << 20)            # headroom


def _pick_batch_block(batch, seq_len, embed_dim, num_heads,
                      target_rows=256,          # M >= 256 suits v6e/v7x MXU
                      min_grid_steps=2,         # keep >=2 parallel steps (v7x 2 TC)
                      vmem_cap_bytes=48 << 20): # stay inside v7x's 64 MiB VMEM
    best = 1
    for bb in range(1, batch + 1):
        if batch % bb != 0:
            continue
        if bb > 1:
            if bb * seq_len > target_rows:
                continue
            if batch // bb < min_grid_steps:
                continue
            if _vmem_budget_bytes(bb, seq_len, embed_dim, num_heads) > vmem_cap_bytes:
                continue
        best = bb
    return best


def multi_head_attention(x, params, num_heads):
    """x: (B, S, E) float32.  params: dict of weights/biases (PyTorch shapes)."""
    B, S, E = x.shape
    D = E // num_heads
    assert D * num_heads == E, "embed_dim must be divisible by num_heads"
    scaling = D ** (-0.5)

    # ---- host-side parameter prep (layout plumbing, outside the hot loop) ----
    # PyTorch Linear weights are (out, in); pre-transpose to (in, out), fuse
    # Q/K/V, fold the 1/sqrt(D) scale into the Q slice, and ship bf16 to the
    # MXU (biases stay f32 and are added to the f32 accumulator).
    w_qkv = jnp.concatenate(
        [params["wq"].T * scaling, params["wk"].T, params["wv"].T],
        axis=1).astype(jnp.bfloat16)                                  # (E, 3E)
    b_qkv = jnp.concatenate(
        [params["bq"] * scaling, params["bk"], params["bv"]]
    ).reshape(1, 3 * E).astype(jnp.float32)
    wo_t = params["wo"].T.astype(jnp.bfloat16)                        # (E, E)
    bo = params["bo"].reshape(1, E).astype(jnp.float32)

    BB = _pick_batch_block(B, S, E, num_heads)
    assert B % BB == 0
    assert (BB * S) % 8 == 0 or B // BB == 1, \
        "block rows (BB*S) must be a multiple of 8 for TPU sublane tiling"
    grid = (B // BB,)
    vmem_bytes = min(max(_vmem_budget_bytes(BB, S, E, num_heads), 4 << 20),
                     64 << 20)

    # Flatten batch*seq so the fused projection sees M = BB*S rows per step.
    x2d = x.reshape(B * S, E).astype(jnp.float32)

    kernel = make_mha_kernel(num_heads, D, BB, S, E)

    out2d = pl.pallas_call(
        kernel,
        out_shape=jax.ShapeDtypeStruct((B * S, E), jnp.float32),
        grid_spec=pltpu.PrefetchScalarGridSpec(
            num_scalar_prefetch=0,
            grid=grid,
            in_specs=[
                pl.BlockSpec((BB * S, E), lambda i: (i, 0)),     # x rows (f32)
                pl.BlockSpec((E, 3 * E), lambda i: (0, 0)),      # fused Wqkv^T (bf16)
                pl.BlockSpec((E, E), lambda i: (0, 0)),          # Wo^T (bf16)
                pl.BlockSpec((1, 3 * E), lambda i: (0, 0)),      # fused qkv bias (f32)
                pl.BlockSpec((1, E), lambda i: (0, 0)),          # bo (f32)
            ],
            out_specs=pl.BlockSpec((BB * S, E), lambda i: (i, 0)),
        ),
        compiler_params=pltpu.CompilerParams(
            dimension_semantics=("parallel",),
            vmem_limit_bytes=vmem_bytes,
        ),
    )(x2d, w_qkv, wo_t, b_qkv, bo)

    return out2d.reshape(B, S, E)


def xavier_uniform(key, shape, dtype=jnp.float32):
    fan_out, fan_in = shape
    limit = math.sqrt(6.0 / (fan_in + fan_out))
    return jax.random.uniform(key, shape, dtype=dtype, minval=-limit, maxval=limit)


def init_params(key, embed_dim):
    k1, k2, k3, k4 = jax.random.split(key, 4)
    E = embed_dim
    return {
        "wq": xavier_uniform(k1, (E, E)),
        "wk": xavier_uniform(k2, (E, E)),
        "wv": xavier_uniform(k3, (E, E)),
        "wo": xavier_uniform(k4, (E, E)),
        "bq": jnp.zeros((E,), jnp.float32),
        "bk": jnp.zeros((E,), jnp.float32),
        "bv": jnp.zeros((E,), jnp.float32),
        "bo": jnp.zeros((E,), jnp.float32),
    }


def reference_mha(x, params, num_heads):
    """Pure-JAX f32 reference mirroring the PyTorch forward."""
    B, S, E = x.shape
    D = E // num_heads
    scaling = D ** (-0.5)
    q = x @ params["wq"].T + params["bq"]
    k = x @ params["wk"].T + params["bk"]
    v = x @ params["wv"].T + params["bv"]
    q = q.reshape(B, S, num_heads, D).transpose(0, 2, 1, 3)
    k = k.reshape(B, S, num_heads, D).transpose(0, 2, 1, 3)
    v = v.reshape(B, S, num_heads, D).transpose(0, 2, 1, 3)
    scores = jnp.einsum("bhsd,bhtd->bhst", q, k) * scaling
    w = jax.nn.softmax(scores, axis=-1)
    o = jnp.einsum("bhst,bhtd->bhsd", w, v)
    o = o.transpose(0, 2, 1, 3).reshape(B, S, E)
    return o @ params["wo"].T + params["bo"]


if __name__ == "__main__":
    B, S, E, H = 2, 8, 32, 8

    key = jax.random.PRNGKey(0)
    kx, kp = jax.random.split(key)
    x = jax.random.normal(kx, (B, S, E), dtype=jnp.float32)
    params = init_params(kp, E)

    out = multi_head_attention(x, params, num_heads=H)
    out = jax.block_until_ready(out)

    ref = reference_mha(x, params, num_heads=H)
    assert out.shape == (B, S, E)
    # Tolerance sized for bf16 MXU operands (8-bit mantissa ~ 0.4% per operand,
    # amplified through exp); softmax statistics and all accumulation are f32.
    # A genuinely wrong kernel (head misalignment etc.) produces O(0.3+) errors
    # and is still caught.
    err = float(jnp.max(jnp.abs(out - ref)))
    assert jnp.allclose(out, ref, atol=3e-2, rtol=3e-2), \
        f"mismatch vs reference (max abs err = {err:.4e})"

    print("KERNEL_OK")
</pallas_src>

<mosaic_0001>
module attributes {stable_mosaic.version = 11 : i64} {
  func.func @mha_kernel(%arg0: i32, %arg1: memref<8x32xf32, #tpu.memory_space<vmem>>, %arg2: memref<32x96xbf16, #tpu.memory_space<vmem>>, %arg3: memref<32x32xbf16, #tpu.memory_space<vmem>>, %arg4: memref<1x96xf32, #tpu.memory_space<vmem>>, %arg5: memref<1x32xf32, #tpu.memory_space<vmem>>, %arg6: memref<8x32xf32, #tpu.memory_space<vmem>>) attributes {dimension_semantics = [#tpu.dimension_semantics<parallel>], iteration_bounds = array<i64: 2>, scalar_prefetch = 0 : i64, scratch_operands = 0 : i64, tpu.core_type = #tpu.core_type<tc>, window_params = [{transform_indices = @transform_0, window_bounds = array<i64: 8, 32>}, {pipeline_mode = #tpu.pipeline_mode<synchronous>, transform_indices = @transform_1, window_bounds = array<i64: 32, 96>}, {pipeline_mode = #tpu.pipeline_mode<synchronous>, transform_indices = @transform_2, window_bounds = array<i64: 32, 32>}, {pipeline_mode = #tpu.pipeline_mode<synchronous>, transform_indices = @transform_3, window_bounds = array<i64: 1, 96>}, {pipeline_mode = #tpu.pipeline_mode<synchronous>, transform_indices = @transform_4, window_bounds = array<i64: 1, 32>}, {transform_indices = @transform_5, window_bounds = array<i64: 8, 32>}]} {
    %c0 = arith.constant 0 : index
    %c0_0 = arith.constant 0 : index
    %0 = vector.load %arg1[%c0, %c0_0] : memref<8x32xf32, #tpu.memory_space<vmem>>, vector<8x32xf32>
    %1 = arith.truncf %0 : vector<8x32xf32> to vector<8x32xbf16>
    %c0_1 = arith.constant 0 : index
    %c0_2 = arith.constant 0 : index
    %2 = vector.load %arg2[%c0_1, %c0_2] : memref<32x96xbf16, #tpu.memory_space<vmem>>, vector<32x96xbf16>
    %cst = arith.constant dense<0.000000e+00> : vector<8x96xf32>
    %3 = tpu.matmul %1, %2, %cst {dimension_numbers = #tpu.dot_dimension_numbers<[1], [0], [0], [1], [0, 0, 1, 1], [], []>} : vector<8x32xbf16>, vector<32x96xbf16>, vector<8x96xf32> -> vector<8x96xf32>
    %c0_3 = arith.constant 0 : index
    %c0_4 = arith.constant 0 : index
    %4 = vector.load %arg4[%c0_3, %c0_4] : memref<1x96xf32, #tpu.memory_space<vmem>>, vector<1x96xf32>
    %5 = vector.broadcast %4 : vector<1x96xf32> to vector<8x96xf32>
    %6 = arith.addf %3, %5 : vector<8x96xf32>
    %7 = vector.extract_strided_slice %6 {offsets = [0, 0], sizes = [8, 32], strides = [1, 1]} : vector<8x96xf32> to vector<8x32xf32>
    %8 = vector.shape_cast %7 : vector<8x32xf32> to vector<1x8x8x4xf32>
    %9 = tpu.transpose %8, [0, 2, 1, 3] : vector<1x8x8x4xf32> -> vector<1x8x8x4xf32>
    %10 = vector.shape_cast %9 : vector<1x8x8x4xf32> to vector<8x8x4xf32>
    %11 = arith.truncf %10 : vector<8x8x4xf32> to vector<8x8x4xbf16>
    %12 = vector.extract_strided_slice %6 {offsets = [0, 32], sizes = [8, 32], strides = [1, 1]} : vector<8x96xf32> to vector<8x32xf32>
    %13 = vector.shape_cast %12 : vector<8x32xf32> to vector<1x8x8x4xf32>
    %14 = tpu.transpose %13, [0, 2, 1, 3] : vector<1x8x8x4xf32> -> vector<1x8x8x4xf32>
    %15 = vector.shape_cast %14 : vector<1x8x8x4xf32> to vector<8x8x4xf32>
    %16 = arith.truncf %15 : vector<8x8x4xf32> to vector<8x8x4xbf16>
    %17 = vector.extract_strided_slice %6 {offsets = [0, 64], sizes = [8, 32], strides = [1, 1]} : vector<8x96xf32> to vector<8x32xf32>
    %18 = vector.shape_cast %17 : vector<8x32xf32> to vector<1x8x8x4xf32>
    %19 = tpu.transpose %18, [0, 2, 1, 3] : vector<1x8x8x4xf32> -> vector<1x8x8x4xf32>
    %20 = vector.shape_cast %19 : vector<1x8x8x4xf32> to vector<8x8x4xf32>
    %21 = arith.truncf %20 : vector<8x8x4xf32> to vector<8x8x4xbf16>
    "tpu.trace_start"() <{level = 10 : i32, message = "bqd,bkd->bqk"}> : () -> ()
    %cst_5 = arith.constant dense<0.000000e+00> : vector<8x8x8xf32>
    %22 = tpu.matmul %11, %16, %cst_5 {dimension_numbers = #tpu.dot_dimension_numbers<[2], [2], [1], [1], [0, 0, 0, 1, 1, 1], [0], [0]>} : vector<8x8x4xbf16>, vector<8x8x4xbf16>, vector<8x8x8xf32> -> vector<8x8x8xf32>
    "tpu.trace_stop"() : () -> ()
    %cst_6 = arith.constant dense<0xFF800000> : vector<8x8xf32>
    %23 = vector.multi_reduction <maximumf>, %22, %cst_6 [2] : vector<8x8x8xf32> to vector<8x8xf32>
    %24 = vector.shape_cast %23 : vector<8x8xf32> to vector<8x8x1xf32>
    %25 = vector.broadcast %24 : vector<8x8x1xf32> to vector<8x8x8xf32>
    %26 = arith.subf %22, %25 : vector<8x8x8xf32>
    %27 = math.exp %26 : vector<8x8x8xf32>
    %cst_7 = arith.constant dense<0.000000e+00> : vector<8x8xf32>
    %28 = vector.multi_reduction <add>, %27, %cst_7 [2] : vector<8x8x8xf32> to vector<8x8xf32>
    %29 = vector.shape_cast %28 : vector<8x8xf32> to vector<8x8x1xf32>
    %30 = vector.broadcast %29 : vector<8x8x1xf32> to vector<8x8x8xf32>
    %31 = arith.divf %27, %30 : vector<8x8x8xf32>
    %32 = arith.truncf %31 : vector<8x8x8xf32> to vector<8x8x8xbf16>
    "tpu.trace_start"() <{level = 10 : i32, message = "bqk,bkd->bqd"}> : () -> ()
    %cst_8 = arith.constant dense<0.000000e+00> : vector<8x8x4xf32>
    %33 = tpu.matmul %32, %21, %cst_8 {dimension_numbers = #tpu.dot_dimension_numbers<[2], [1], [1], [2], [0, 0, 0, 1, 1, 2], [0], [0]>} : vector<8x8x8xbf16>, vector<8x8x4xbf16>, vector<8x8x4xf32> -> vector<8x8x4xf32>
    "tpu.trace_stop"() : () -> ()
    %34 = vector.shape_cast %33 : vector<8x8x4xf32> to vector<1x8x8x4xf32>
    %35 = tpu.transpose %34, [0, 2, 1, 3] : vector<1x8x8x4xf32> -> vector<1x8x8x4xf32>
    %36 = vector.shape_cast %35 : vector<1x8x8x4xf32> to vector<8x32xf32>
    %37 = arith.truncf %36 : vector<8x32xf32> to vector<8x32xbf16>
    %c0_9 = arith.constant 0 : index
    %c0_10 = arith.constant 0 : index
    %38 = vector.load %arg3[%c0_9, %c0_10] : memref<32x32xbf16, #tpu.memory_space<vmem>>, vector<32x32xbf16>
    %cst_11 = arith.constant dense<0.000000e+00> : vector<8x32xf32>
    %39 = tpu.matmul %37, %38, %cst_11 {dimension_numbers = #tpu.dot_dimension_numbers<[1], [0], [0], [1], [0, 0, 1, 1], [], []>} : vector<8x32xbf16>, vector<32x32xbf16>, vector<8x32xf32> -> vector<8x32xf32>
    %c0_12 = arith.constant 0 : index
    %c0_13 = arith.constant 0 : index
    %40 = vector.load %arg5[%c0_12, %c0_13] : memref<1x32xf32, #tpu.memory_space<vmem>>, vector<1x32xf32>
    %41 = vector.broadcast %40 : vector<1x32xf32> to vector<8x32xf32>
    %42 = arith.addf %39, %41 : vector<8x32xf32>
    %c0_14 = arith.constant 0 : index
    %c0_15 = arith.constant 0 : index
    %43 = vector.load %arg6[%c0_14, %c0_15] : memref<8x32xf32, #tpu.memory_space<vmem>>, vector<8x32xf32>
    tpu.vector_store %arg6[%c0_14, %c0_15], %42 {strides = array<i32>} : memref<8x32xf32, #tpu.memory_space<vmem>>, vector<8x32xf32>,
    return
  }
  func.func @transform_0(%arg0: i32) -> (i32, i32) {
    %c0_i32 = arith.constant 0 : i32
    %c0_i32_0 = arith.constant 0 : i32
    return %arg0, %c0_i32 : i32, i32
  }
  func.func @transform_1(%arg0: i32) -> (i32, i32) {
    %c0_i32 = arith.constant 0 : i32
    %c0_i32_0 = arith.constant 0 : i32
    %c0_i32_1 = arith.constant 0 : i32
    return %c0_i32, %c0_i32_0 : i32, i32
  }
  func.func @transform_2(%arg0: i32) -> (i32, i32) {
    %c0_i32 = arith.constant 0 : i32
    %c0_i32_0 = arith.constant 0 : i32
    %c0_i32_1 = arith.constant 0 : i32
    return %c0_i32, %c0_i32_0 : i32, i32
  }
  func.func @transform_3(%arg0: i32) -> (i32, i32) {
    %c0_i32 = arith.constant 0 : i32
    %c0_i32_0 = arith.constant 0 : i32
    %c0_i32_1 = arith.constant 0 : i32
    return %c0_i32, %c0_i32_0 : i32, i32
  }
  func.func @transform_4(%arg0: i32) -> (i32, i32) {
    %c0_i32 = arith.constant 0 : i32
    %c0_i32_0 = arith.constant 0 : i32
    %c0_i32_1 = arith.constant 0 : i32
    return %c0_i32, %c0_i32_0 : i32, i32
  }
  func.func @transform_5(%arg0: i32) -> (i32, i32) {
    %c0_i32 = arith.constant 0 : i32
    %c0_i32_0 = arith.constant 0 : i32
    return %arg0, %c0_i32 : i32, i32
  }
}

</mosaic_0001>

<llo_original>
// kernel: tpu_custom_call.1
$region0: #{tpu_custom_call.1}
  #allocation0 [shape = 'u32[]', space=smem, size = 0x4, offset = 0x4, fixed_abs, tag = 'smem constant byte address 0x4 - core index']
  #allocation1 [shape = 'u32[72,128]{1,0:T(1,128)}', space=vmem, size = 0x9000, scoped, tag = 'internal scratch']
  %s0 = inlined_call_operand.hbm [shape: f32[16,32], index: 0, kind: input, shape index: {}]
  %s1 = inlined_call_operand.hbm [shape: bf16[32,96], index: 1, kind: input, shape index: {}]
  %s2 = inlined_call_operand.hbm [shape: bf16[32,32], index: 2, kind: input, shape index: {}]
  %s3 = inlined_call_operand.vmem [shape: f32[1,96], index: 3, kind: input, shape index: {}]
  %s4 = inlined_call_operand.vmem [shape: f32[1,32], index: 4, kind: input, shape index: {}]
  %s5 = inlined_call_operand.hbm [shape: f32[16,32], index: 5, kind: output, shape index: {}]
  %s6 = sld [smem:[#allocation0]]
  $region65: #{tpu_custom_call.1} parent=0
    _
  %s8 = ssub.s32 1, %s6
  %s9 = scalar_select 0, %s8, %s6
  $region1: #{tpu_custom_call.1} parent=0
    #allocation2 [shape = 'u8[8192]{0}', space=vmem, size = 0x2000, scoped, tag = 'input window, operand 0']
    #allocation3 [shape = 's32[2]{0}', space=sflag, size = 0x8, scoped, tag = 'scoped memory for tpu_custom_call.1']
    #allocation4 [shape = 's32[2]{0}', space=sflag, size = 0x8, scoped, tag = 'scoped memory for tpu_custom_call.1']
    #allocation5 [shape = 'u8[8192]{0}', space=vmem, size = 0x2000, scoped, tag = 'input window, operand 1, single buffered']
    #allocation6 [shape = 's32[1]{0}', space=sflag, size = 0x4, scoped, tag = 'scoped memory for tpu_custom_call.1']
    #allocation7 [shape = 'u8[8192]{0}', space=vmem, size = 0x2000, scoped, tag = 'input window, operand 2, single buffered']
    #allocation8 [shape = 'u8[8192]{0}', space=vmem, size = 0x2000, scoped, tag = 'output window, operand 0']
    %10 = vsyncpa [#allocation3], 0
    %s11 = scalar_lea.sflag [#allocation3], 1
    %12 = vsyncpa %s11, 0
    %13 = vsyncpa [#allocation6], 0
    %14 = vsyncpa [#allocation4], 0
    %s15 = scalar_lea.sflag [#allocation4], 1
    %16 = vsyncpa %s15, 0
    loop: start=0, step=1, limit=4
    $region2: #{tpu_custom_call.1} parent=1 // loop_pre_header
      _
    $region3: #{tpu_custom_call.1} parent=1 // loop_header
      %s18 = sphi 0, %s22
      %p19 = scmp.ge.s32.totalorder %s18, 4
      %s28 = sphi 0, %s30
      %s31 = sphi 0, %s28
      %s32 = sphi 0, %s31
      %s48 = sphi 0, %s32
      %s52 = sphi 0, %s52
      %s54 = sphi 0, %s52
      %s55 = sphi 0, %s54
      %s69 = sphi 0, %s55
      %s73 = sphi 0, %s73
      %s75 = sphi 0, %s73
      %s76 = sphi 0, %s75
      %s90 = sphi 0, %s76
      %s94 = sphi 0, %s94
      %s96 = sphi 0, %s94
      %s97 = sphi 0, %s96
      %s111 = sphi 0, %s97
      %s115 = sphi 0, %s115
      %s117 = sphi 0, %s115
      %s118 = sphi 0, %s117
      %s132 = sphi 0, %s118
      %s138 = sphi 0, %s140
      %s141 = sphi 0, %s138
      %s142 = sphi 0, %s141
      %s158 = sphi 0, %s142
    $region4: #{tpu_custom_call.1} parent=1 // loop_header_branch
      %21 = sbr.rel (%p19) target = $region8
    $region5: #{tpu_custom_call.1} parent=1 // loop_body
      %s23 = ssub.s32 %s18, 1
      %s24 = ssub.s32 %s18, 2
      %s25 = sadd.s32 %s18, 1
      %s26 = ssub.s32 %s18, %s25
      %p27 = scmp.eq.s32.totalorder %s26, 0
      %s29 = sadd.s32 %s28, 1
      %s30 = scalar_select %p27, %s28, %s29
      %p33 = pneg %p27
      %p34 = scmp.eq.s32.totalorder %s18, 1
      %p35 = por %p33, %p34
      %p36 = scmp.ne.s32.totalorder %s28, %s31
      %p37 = scmp.eq.s32.totalorder %s18, 0
      %p38 = por %p36, %p37
      %p39 = scmp.ne.s32.totalorder %s28, %s31
      %p40 = scmp.eq.s32.totalorder %s23, 1
      %p41 = por %p39, %p40
      %p42 = scmp.ne.s32.totalorder %s31, %s32
      %p43 = scmp.eq.s32.totalorder %s23, 0
      %p44 = por %p42, %p43
      %p45 = scmp.ne.s32.totalorder %s31, %s32
      %p46 = scmp.eq.s32.totalorder %s24, 1
      %p47 = por %p45, %p46
      %p49 = scmp.ne.s32.totalorder %s32, %s48
      %p50 = scmp.eq.s32.totalorder %s24, 0
      %p51 = por %p49, %p50
      %s53 = sadd.s32 %s52, 1
      %p56 = scmp.eq.s32.totalorder %s18, 1
      %p57 = scmp.ne.s32.totalorder %s52, %s54
      %p58 = scmp.eq.s32.totalorder %s18, 0
      %p59 = por %p57, %p58
      %p60 = scmp.ne.s32.totalorder %s52, %s54
      %p61 = scmp.eq.s32.totalorder %s23, 1
      %p62 = por %p60, %p61
      %p63 = scmp.ne.s32.totalorder %s54, %s55
      %p64 = scmp.eq.s32.totalorder %s23, 0
      %p65 = por %p63, %p64
      %p66 = scmp.ne.s32.totalorder %s54, %s55
      %p67 = scmp.eq.s32.totalorder %s24, 1
      %p68 = por %p66, %p67
      %p70 = scmp.ne.s32.totalorder %s55, %s69
      %p71 = scmp.eq.s32.totalorder %s24, 0
      %p72 = por %p70, %p71
      %s74 = sadd.s32 %s73, 1
      %p77 = scmp.eq.s32.totalorder %s18, 1
      %p78 = scmp.ne.s32.totalorder %s73, %s75
      %p79 = scmp.eq.s32.totalorder %s18, 0
      %p80 = por %p78, %p79
      %p81 = scmp.ne.s32.totalorder %s73, %s75
      %p82 = scmp.eq.s32.totalorder %s23, 1
      %p83 = por %p81, %p82
      %p84 = scmp.ne.s32.totalorder %s75, %s76
      %p85 = scmp.eq.s32.totalorder %s23, 0
      %p86 = por %p84, %p85
      %p87 = scmp.ne.s32.totalorder %s75, %s76
      %p88 = scmp.eq.s32.totalorder %s24, 1
      %p89 = por %p87, %p88
      %p91 = scmp.ne.s32.totalorder %s76, %s90
      %p92 = scmp.eq.s32.totalorder %s24, 0
      %p93 = por %p91, %p92
      %s95 = sadd.s32 %s94, 1
      %p98 = scmp.eq.s32.totalorder %s18, 1
      %p99 = scmp.ne.s32.totalorder %s94, %s96
      %p100 = scmp.eq.s32.totalorder %s18, 0
      %p101 = por %p99, %p100
      %p102 = scmp.ne.s32.totalorder %s94, %s96
      %p103 = scmp.eq.s32.totalorder %s23, 1
      %p104 = por %p102, %p103
      %p105 = scmp.ne.s32.totalorder %s96, %s97
      %p106 = scmp.eq.s32.totalorder %s23, 0
      %p107 = por %p105, %p106
      %p108 = scmp.ne.s32.totalorder %s96, %s97
      %p109 = scmp.eq.s32.totalorder %s24, 1
      %p110 = por %p108, %p109
      %p112 = scmp.ne.s32.totalorder %s97, %s111
      %p113 = scmp.eq.s32.totalorder %s24, 0
      %p114 = por %p112, %p113
      %s116 = sadd.s32 %s115, 1
      %p119 = scmp.eq.s32.totalorder %s18, 1
      %p120 = scmp.ne.s32.totalorder %s115, %s117
      %p121 = scmp.eq.s32.totalorder %s18, 0
      %p122 = por %p120, %p121
      %p123 = scmp.ne.s32.totalorder %s115, %s117
      %p124 = scmp.eq.s32.totalorder %s23, 1
      %p125 = por %p123, %p124
      %p126 = scmp.ne.s32.totalorder %s117, %s118
      %p127 = scmp.eq.s32.totalorder %s23, 0
      %p128 = por %p126, %p127
      %p129 = scmp.ne.s32.totalorder %s117, %s118
      %p130 = scmp.eq.s32.totalorder %s24, 1
      %p131 = por %p129, %p130
      %p133 = scmp.ne.s32.totalorder %s118, %s132
      %p134 = scmp.eq.s32.totalorder %s24, 0
      %p135 = por %p133, %p134
      %s136 = ssub.s32 %s18, %s25
      %p137 = scmp.eq.s32.totalorder %s136, 0
      %s139 = sadd.s32 %s138, 1
      %s140 = scalar_select %p137, %s138, %s139
      %p143 = pneg %p137
      %p144 = scmp.eq.s32.totalorder %s18, 1
      %p145 = por %p143, %p144
      %p146 = scmp.ne.s32.totalorder %s138, %s141
      %p147 = scmp.eq.s32.totalorder %s18, 0
      %p148 = por %p146, %p147
      %p149 = scmp.ne.s32.totalorder %s138, %s141
      %p150 = scmp.eq.s32.totalorder %s23, 1
      %p151 = por %p149, %p150
      %p152 = scmp.ne.s32.totalorder %s141, %s142
      %p153 = scmp.eq.s32.totalorder %s23, 0
      %p154 = por %p152, %p153
      %p155 = scmp.ne.s32.totalorder %s141, %s142
      %p156 = scmp.eq.s32.totalorder %s24, 1
      %p157 = por %p155, %p156
      %p159 = scmp.ne.s32.totalorder %s142, %s158
      %p160 = scmp.eq.s32.totalorder %s24, 0
      %p161 = por %p159, %p160
      %p162 = scmp.le.s32.totalorder 1, %s18
      %p163 = scmp.lt.s32.totalorder %s18, 3
      %p164 = pnand %p162, %p163
      %p165 = pneg %p164
      // Predicated region
      $region9: #{tpu_custom_call.1} parent=5 // pred_check
        _
      $region10: #{tpu_custom_call.1} parent=5 // pred_check_branch
        %167 = sbr.rel (%p164) target = $region12
      $region11: #{tpu_custom_call.1} parent=5 // pred_region
        %s168 = ssub.s32 %s18, 1
        // Predicated region
        $region13: #{tpu_custom_call.1} parent=11 // pred_check
          %p169 = pneg %p65
        $region14: #{tpu_custom_call.1} parent=11 // pred_check_branch
          %171 = sbr.rel (%p169) target = $region16
        $region15: #{tpu_custom_call.1} parent=11 // pred_region
          %173 = vsyncadd [#allocation6], 0
          %s174 = sshll.u32 %s1, 4
          %s175 = int_to_ptr.hbm [resolvable:$true] %s174
          %s176 = sshll.u32 [#allocation5], 4
          %s177 = int_to_ptr.vmem [resolvable:$true] %s176
          %182 = dma.hbm_to_vmem [thread:$0]  %s175, 256, %s177, [#allocation6], 64, 64, 4
        $region16: #{tpu_custom_call.1} parent=11 // pred_fallthru
          _
        // Predicated region
        $region17: #{tpu_custom_call.1} parent=11 // pred_check
          %p183 = pneg %p86
        $region18: #{tpu_custom_call.1} parent=11 // pred_check_branch
          %185 = sbr.rel (%p183) target = $region20
        $region19: #{tpu_custom_call.1} parent=11 // pred_region
          %187 = vsyncadd [#allocation6], 0
          %s188 = sshll.u32 %s2, 4
          %s189 = int_to_ptr.hbm [resolvable:$true] %s188
          %s190 = sshll.u32 [#allocation7], 4
          %s191 = int_to_ptr.vmem [resolvable:$true] %s190
          %196 = dma.hbm_to_vmem [thread:$0]  %s189, 256, %s191, [#allocation6], 64, 64, 4
        $region20: #{tpu_custom_call.1} parent=11 // pred_fallthru
          _
        // Predicated region
        $region21: #{tpu_custom_call.1} parent=11 // pred_check
          %p197 = pneg %p107
        $region22: #{tpu_custom_call.1} parent=11 // pred_check_branch
          %199 = sbr.rel (%p197) target = $region24
        $region23: #{tpu_custom_call.1} parent=11 // pred_region
          _
        $region24: #{tpu_custom_call.1} parent=11 // pred_fallthru
          _
        // Predicated region
        $region25: #{tpu_custom_call.1} parent=11 // pred_check
          %p200 = pneg %p128
        $region26: #{tpu_custom_call.1} parent=11 // pred_check_branch
          %202 = sbr.rel (%p200) target = $region28
        $region27: #{tpu_custom_call.1} parent=11 // pred_region
          _
        $region28: #{tpu_custom_call.1} parent=11 // pred_fallthru
          _
      $region12: #{tpu_custom_call.1} parent=5 // pred_fallthru
        _
      %p203 = scmp.lt.s32.totalorder %s18, 2
      // Predicated region
      $region29: #{tpu_custom_call.1} parent=5 // pred_check
        %p204 = pneg %p203
      $region30: #{tpu_custom_call.1} parent=5 // pred_check_branch
        %206 = sbr.rel (%p204) target = $region32
      $region31: #{tpu_custom_call.1} parent=5 // pred_region
        // Predicated region
        $region33: #{tpu_custom_call.1} parent=31 // pred_check
          %p207 = pneg %p38
        $region34: #{tpu_custom_call.1} parent=31 // pred_check_branch
          %209 = sbr.rel (%p207) target = $region36
        $region35: #{tpu_custom_call.1} parent=31 // pred_region
          %s210 = sand.u32 %s28, 1
          %s211 = scalar_lea.sflag [#allocation3], %s210
          %s212 = sand.u32 %s28, 1
          %s213 = smul.addr %s212, 8
          %s214 = scalar_lea.vmem [#allocation2], %s213
          %216 = vsyncadd %s211, 0
          %s217 = smul.addr %s18, 8
          %s218 = scalar_lea.hbm %s0, %s217
          %s220 = sshll.u32 %s218, 4
          %s221 = int_to_ptr.hbm [resolvable:$true] %s220
          %s222 = sshll.u32 %s214, 4
          %s223 = int_to_ptr.vmem [resolvable:$true] %s222
          %225 = dma.hbm_to_vmem [thread:$0]  %s221, 128, %s223, %s211
        $region36: #{tpu_custom_call.1} parent=31 // pred_fallthru
          _
      $region32: #{tpu_custom_call.1} parent=5 // pred_fallthru
        _
      %p226 = scmp.le.s32.totalorder 1, %s18
      %p227 = scmp.lt.s32.totalorder %s18, 3
      %p228 = pnand %p226, %p227
      %p229 = pneg %p228
      // Predicated region
      $region37: #{tpu_custom_call.1} parent=5 // pred_check
        _
      $region38: #{tpu_custom_call.1} parent=5 // pred_check_branch
        %231 = sbr.rel (%p228) target = $region40
      $region39: #{tpu_custom_call.1} parent=5 // pred_region
        %s232 = ssub.s32 %s18, 1
        %s233 = sand.u32 %s31, 1
        %s234 = scalar_lea.sflag [#allocation3], %s233
        %s235 = sand.u32 %s31, 1
        %s236 = smul.addr %s235, 8
        %s237 = scalar_lea.vmem [#allocation2], %s236
        // Predicated region
        $region41: #{tpu_custom_call.1} parent=39 // pred_check
          %p238 = pneg %p44
        $region42: #{tpu_custom_call.1} parent=39 // pred_check_branch
          %240 = sbr.rel (%p238) target = $region44
        $region43: #{tpu_custom_call.1} parent=39 // pred_region
          %242 = dma.done %s234, 128
        $region44: #{tpu_custom_call.1} parent=39 // pred_fallthru
          _
        // Predicated region
        $region45: #{tpu_custom_call.1} parent=39 // pred_check
          %p243 = pneg %p65
        $region46: #{tpu_custom_call.1} parent=39 // pred_check_branch
          %245 = sbr.rel (%p243) target = $region48
        $region47: #{tpu_custom_call.1} parent=39 // pred_region
          %247 = dma.done [#allocation6], 256
        $region48: #{tpu_custom_call.1} parent=39 // pred_fallthru
          _
        // Predicated region
        $region49: #{tpu_custom_call.1} parent=39 // pred_check
          %p248 = pneg %p86
        $region50: #{tpu_custom_call.1} parent=39 // pred_check_branch
          %250 = sbr.rel (%p248) target = $region52
        $region51: #{tpu_custom_call.1} parent=39 // pred_region
          %252 = dma.done [#allocation6], 256
        $region52: #{tpu_custom_call.1} parent=39 // pred_fallthru
          _
        %s253 = sand.u32 %s31, 1
        %s254 = scalar_lea.sflag [#allocation3], %s253
        %s255 = sand.u32 %s31, 1
        %s256 = smul.addr %s255, 8
        %s257 = scalar_lea.vmem [#allocation2], %s256
        %p258 = pneg %p44
        %p259 = pneg %p41
        %p260 = pneg %p65
        %p261 = pneg %p62
        %p262 = pneg %p86
        %p263 = pneg %p83
        %p264 = pneg %p107
        %p265 = pneg %p104
        %p266 = pneg %p128
        %p267 = pneg %p125
        %p268 = pneg %p154
        %p269 = pneg %p151
        %s270 = sand.u32 %s141, 1
        %s271 = scalar_lea.sflag [#allocation4], %s270
        %s272 = sand.u32 %s141, 1
        %s273 = smul.addr %s272, 8
        %s274 = scalar_lea.vmem [#allocation8], %s273
        %v276 = vld [vmem:[%s237] sm:$0xff]
        %v277 = vpack.c.bf16 %v276, %v276
        %v278 = vld [vmem:[#allocation5] sm:$0xf]
        %v279 = vld [vmem:[#allocation5 + $0x4] sm:$0xf]
        %v280 = vld [vmem:[#allocation5 + $0x8] sm:$0xf]
        %v281 = vld [vmem:[#allocation5 + $0xc] sm:$0xf]
        %v282 = vld [vmem:[%s3] sm:$0x1]
        %v284 = vperm.slane %v282, 0
        %v290 = vunpack.c.l.b16 %v278
        %v291 = vunpack.c.l.b16 %v279
        %v292 = vunpack.c.l.b16 %v280
        %v293 = vunpack.c.l.b16 %v281
        %v294 = vpack.c.b16 %v291, %v290
        %v295 = vpack.c.b16 %v293, %v292
        %vm298 = vcmask 261120
        %v300 = vsel %vm298, %v277, 0
        %302 = vmatpush.bf16.msra.mxu0 0
        %303 = vmatpush.bf16.msra.mxu0 0
        %304 = vmatpush.bf16.msra.mxu0 0
        %305 = vmatpush.bf16.msra.mxu0 0
        %306 = vmatpush.bf16.msra.mxu0 0
        %307 = vmatpush.bf16.msra.mxu0 0
        %308 = vmatpush.bf16.msra.mxu0 %v295
        %309 = vmatpush.bf16.msra.mxu0 %v294
        %310 = vmatmul.bf16.gmra.mxu0 %v300
        %v311 = vpop.f32.mrf.mxu0
        %v312 = vadd.f32 %v284, %v311
        %v313 = vpop.f32.mrf.mxu0
        %314 = vdwg.mxu0
        %316 = vrot.lane.b32.xlu0 %v312, 124
        %v317 = vpop.permute.xlu0 %316
        %319 = vrot.lane.b32.xlu0 %v312, 120
        %v320 = vpop.permute.xlu0 %319
        %322 = vrot.lane.b32.xlu0 %v312, 116
        %v323 = vpop.permute.xlu0 %322
        %325 = vrot.lane.b32.xlu0 %v312, 112
        %v326 = vpop.permute.xlu0 %325
        %328 = vrot.lane.b32.xlu0 %v312, 108
        %v329 = vpop.permute.xlu0 %328
        %331 = vrot.lane.b32.xlu0 %v312, 104
        %v332 = vpop.permute.xlu0 %331
        %334 = vrot.lane.b32.xlu0 %v312, 100
        %v335 = vpop.permute.xlu0 %334
        %v337 = vrot.slane %v320, 4
        %vm338 = vcmask 1047556
        %v339 = vsel %vm338, %v337, %v312
        %v340 = vrot.slane %v312, 4
        %v341 = vsel %vm338, %v320, %v340
        %v343 = vunpack.c.l.s4 1983009808
        %v344 = vunpack.c.0.s8 %v343
        %v345 = vperm.slane %v339, %v344
        %v347 = vunpack.c.l.s4 1983009808
        %v348 = vunpack.c.0.s8 %v347
        %v349 = vperm.slane %v341, %v348
        %v350 = vrot.slane %v323, 4
        %v351 = vsel %vm338, %v350, %v317
        %v352 = vrot.slane %v317, 4
        %v353 = vsel %vm338, %v323, %v352
        %v355 = vunpack.c.l.s4 1983009808
        %v356 = vunpack.c.0.s8 %v355
        %v357 = vperm.slane %v351, %v356
        %v359 = vunpack.c.l.s4 1983009808
        %v360 = vunpack.c.0.s8 %v359
        %v361 = vperm.slane %v353, %v360
        %v362 = vrot.slane %v332, 4
        %v363 = vsel %vm338, %v362, %v326
        %v364 = vrot.slane %v326, 4
        %v365 = vsel %vm338, %v332, %v364
        %v367 = vunpack.c.l.s4 1983009808
        %v368 = vunpack.c.0.s8 %v367
        %v369 = vperm.slane %v363, %v368
        %v371 = vunpack.c.l.s4 1983009808
        %v372 = vunpack.c.0.s8 %v371
        %v373 = vperm.slane %v365, %v372
        %v374 = vrot.slane %v335, 4
        %v375 = vsel %vm338, %v374, %v329
        %v376 = vrot.slane %v329, 4
        %v377 = vsel %vm338, %v335, %v376
        %v379 = vunpack.c.l.s4 1983009808
        %v380 = vunpack.c.0.s8 %v379
        %v381 = vperm.slane %v375, %v380
        %v383 = vunpack.c.l.s4 1983009808
        %v384 = vunpack.c.0.s8 %v383
        %v385 = vperm.slane %v377, %v384
        %v386 = vrot.slane %v357, 4
        %v387 = vsel %vm338, %v386, %v345
        %v388 = vrot.slane %v345, 4
        %v389 = vsel %vm338, %v357, %v388
        %v391 = vunpack.c.l.s4 1934713408
        %v392 = vunpack.c.0.s8 %v391
        %v393 = vperm.slane %v387, %v392
        %v395 = vunpack.c.l.s4 1934713408
        %v396 = vunpack.c.0.s8 %v395
        %v397 = vperm.slane %v389, %v396
        %v398 = vrot.slane %v361, 4
        %v399 = vsel %vm338, %v398, %v349
        %v400 = vrot.slane %v349, 4
        %v401 = vsel %vm338, %v361, %v400
        %v403 = vunpack.c.l.s4 1934713408
        %v404 = vunpack.c.0.s8 %v403
        %v405 = vperm.slane %v399, %v404
        %v407 = vunpack.c.l.s4 1934713408
        %v408 = vunpack.c.0.s8 %v407
        %v409 = vperm.slane %v401, %v408
        %v410 = vrot.slane %v381, 4
        %v411 = vsel %vm338, %v410, %v369
        %v412 = vrot.slane %v369, 4
        %v413 = vsel %vm338, %v381, %v412
        %v415 = vunpack.c.l.s4 1934713408
        %v416 = vunpack.c.0.s8 %v415
        %v417 = vperm.slane %v411, %v416
        %v419 = vunpack.c.l.s4 1934713408
        %v420 = vunpack.c.0.s8 %v419
        %v421 = vperm.slane %v413, %v420
        %v422 = vrot.slane %v385, 4
        %v423 = vsel %vm338, %v422, %v373
        %v424 = vrot.slane %v373, 4
        %v425 = vsel %vm338, %v385, %v424
        %v427 = vunpack.c.l.s4 1934713408
        %v428 = vunpack.c.0.s8 %v427
        %v429 = vperm.slane %v423, %v428
        %v431 = vunpack.c.l.s4 1934713408
        %v432 = vunpack.c.0.s8 %v431
        %v433 = vperm.slane %v425, %v432
        %v434 = vrot.slane %v417, 4
        %v435 = vsel %vm338, %v434, %v393
        %v436 = vrot.slane %v393, 4
        %v437 = vsel %vm338, %v417, %v436
        %v438 = vrot.slane %v421, 4
        %v439 = vsel %vm338, %v438, %v397
        %v440 = vrot.slane %v397, 4
        %v441 = vsel %vm338, %v421, %v440
        %v442 = vrot.slane %v429, 4
        %v443 = vsel %vm338, %v442, %v405
        %v444 = vrot.slane %v405, 4
        %v445 = vsel %vm338, %v429, %v444
        %v446 = vrot.slane %v433, 4
        %v447 = vsel %vm338, %v446, %v409
        %v448 = vrot.slane %v409, 4
        %v449 = vsel %vm338, %v433, %v448
        %v450 = vrot.slane %v439, 4
        %v451 = vsel %vm338, %v450, %v435
        %v452 = vrot.slane %v435, 4
        %v453 = vsel %vm338, %v439, %v452
        %v455 = vunpack.c.l.s4 1983009808
        %v456 = vunpack.c.0.s8 %v455
        %v457 = vperm.slane %v451, %v456
        %v459 = vunpack.c.l.s4 1983009808
        %v460 = vunpack.c.0.s8 %v459
        %v461 = vperm.slane %v453, %v460
        %v462 = vrot.slane %v441, 4
        %v463 = vsel %vm338, %v462, %v437
        %v464 = vrot.slane %v437, 4
        %v465 = vsel %vm338, %v441, %v464
        %v467 = vunpack.c.l.s4 1983009808
        %v468 = vunpack.c.0.s8 %v467
        %v469 = vperm.slane %v463, %v468
        %v471 = vunpack.c.l.s4 1983009808
        %v472 = vunpack.c.0.s8 %v471
        %v473 = vperm.slane %v465, %v472
        %v474 = vrot.slane %v447, 4
        %v475 = vsel %vm338, %v474, %v443
        %v476 = vrot.slane %v443, 4
        %v477 = vsel %vm338, %v447, %v476
        %v479 = vunpack.c.l.s4 1983009808
        %v480 = vunpack.c.0.s8 %v479
        %v481 = vperm.slane %v475, %v480
        %v483 = vunpack.c.l.s4 1983009808
        %v484 = vunpack.c.0.s8 %v483
        %v485 = vperm.slane %v477, %v484
        %v486 = vrot.slane %v449, 4
        %v487 = vsel %vm338, %v486, %v445
        %v488 = vrot.slane %v445, 4
        %v489 = vsel %vm338, %v449, %v488
        %v491 = vunpack.c.l.s4 1983009808
        %v492 = vunpack.c.0.s8 %v491
        %v493 = vperm.slane %v487, %v492
        %v495 = vunpack.c.l.s4 1983009808
        %v496 = vunpack.c.0.s8 %v495
        %v497 = vperm.slane %v489, %v496
        %v498 = vrot.slane %v469, 4
        %v499 = vsel %vm338, %v498, %v457
        %v500 = vrot.slane %v457, 4
        %v501 = vsel %vm338, %v469, %v500
        %v503 = vunpack.c.l.s4 1934713408
        %v504 = vunpack.c.0.s8 %v503
        %v505 = vperm.slane %v499, %v504
        %v507 = vunpack.c.l.s4 1934713408
        %v508 = vunpack.c.0.s8 %v507
        %v509 = vperm.slane %v501, %v508
        %v510 = vrot.slane %v473, 4
        %v511 = vsel %vm338, %v510, %v461
        %v512 = vrot.slane %v461, 4
        %v513 = vsel %vm338, %v473, %v512
        %v515 = vunpack.c.l.s4 1934713408
        %v516 = vunpack.c.0.s8 %v515
        %v517 = vperm.slane %v511, %v516
        %v519 = vunpack.c.l.s4 1934713408
        %v520 = vunpack.c.0.s8 %v519
        %v521 = vperm.slane %v513, %v520
        %v522 = vrot.slane %v493, 4
        %v523 = vsel %vm338, %v522, %v481
        %v524 = vrot.slane %v481, 4
        %v525 = vsel %vm338, %v493, %v524
        %v527 = vunpack.c.l.s4 1934713408
        %v528 = vunpack.c.0.s8 %v527
        %v529 = vperm.slane %v523, %v528
        %v531 = vunpack.c.l.s4 1934713408
        %v532 = vunpack.c.0.s8 %v531
        %v533 = vperm.slane %v525, %v532
        %v534 = vrot.slane %v497, 4
        %v535 = vsel %vm338, %v534, %v485
        %v536 = vrot.slane %v485, 4
        %v537 = vsel %vm338, %v497, %v536
        %v539 = vunpack.c.l.s4 1934713408
        %v540 = vunpack.c.0.s8 %v539
        %v541 = vperm.slane %v535, %v540
        %v543 = vunpack.c.l.s4 1934713408
        %v544 = vunpack.c.0.s8 %v543
        %v545 = vperm.slane %v537, %v544
        %v546 = vrot.slane %v529, 4
        %v547 = vsel %vm338, %v546, %v505
        %v548 = vrot.slane %v505, 4
        %v549 = vsel %vm338, %v529, %v548
        %v550 = vrot.slane %v533, 4
        %v551 = vsel %vm338, %v550, %v509
        %v552 = vrot.slane %v509, 4
        %v553 = vsel %vm338, %v533, %v552
        %v554 = vrot.slane %v541, 4
        %v555 = vsel %vm338, %v554, %v517
        %v556 = vrot.slane %v517, 4
        %v557 = vsel %vm338, %v541, %v556
        %v558 = vrot.slane %v545, 4
        %v559 = vsel %vm338, %v558, %v521
        %v560 = vrot.slane %v521, 4
        %v561 = vsel %vm338, %v545, %v560
        %v562 = vpack.c.bf16 %v547, %v547
        %v563 = vpack.c.bf16 %v549, %v549
        %v564 = vpack.c.bf16 %v551, %v551
        %v565 = vpack.c.bf16 %v553, %v553
        %v566 = vpack.c.bf16 %v555, %v555
        %v567 = vpack.c.bf16 %v557, %v557
        %v568 = vpack.c.bf16 %v559, %v559
        %v569 = vpack.c.bf16 %v561, %v561
        %570 = vrot.lane.b32.xlu0 %v312, 96
        %v571 = vpop.permute.xlu0 %570
        %572 = vrot.lane.b32.xlu0 %v317, 96
        %v573 = vpop.permute.xlu0 %572
        %574 = vrot.lane.b32.xlu0 %v320, 96
        %v575 = vpop.permute.xlu0 %574
        %576 = vrot.lane.b32.xlu0 %v323, 96
        %v577 = vpop.permute.xlu0 %576
        %578 = vrot.lane.b32.xlu0 %v326, 96
        %v579 = vpop.permute.xlu0 %578
        %580 = vrot.lane.b32.xlu0 %v329, 96
        %v581 = vpop.permute.xlu0 %580
        %582 = vrot.lane.b32.xlu0 %v332, 96
        %v583 = vpop.permute.xlu0 %582
        %584 = vrot.lane.b32.xlu0 %v335, 96
        %v585 = vpop.permute.xlu0 %584
        %v594 = vrot.slane %v575, 4
        %v595 = vsel %vm338, %v594, %v571
        %v596 = vrot.slane %v571, 4
        %v597 = vsel %vm338, %v575, %v596
        %v599 = vunpack.c.l.s4 1983009808
        %v600 = vunpack.c.0.s8 %v599
        %v601 = vperm.slane %v595, %v600
        %v603 = vunpack.c.l.s4 1983009808
        %v604 = vunpack.c.0.s8 %v603
        %v605 = vperm.slane %v597, %v604
        %v606 = vrot.slane %v577, 4
        %v607 = vsel %vm338, %v606, %v573
        %v608 = vrot.slane %v573, 4
        %v609 = vsel %vm338, %v577, %v608
        %v611 = vunpack.c.l.s4 1983009808
        %v612 = vunpack.c.0.s8 %v611
        %v613 = vperm.slane %v607, %v612
        %v615 = vunpack.c.l.s4 1983009808
        %v616 = vunpack.c.0.s8 %v615
        %v617 = vperm.slane %v609, %v616
        %v618 = vrot.slane %v583, 4
        %v619 = vsel %vm338, %v618, %v579
        %v620 = vrot.slane %v579, 4
        %v621 = vsel %vm338, %v583, %v620
        %v623 = vunpack.c.l.s4 1983009808
        %v624 = vunpack.c.0.s8 %v623
        %v625 = vperm.slane %v619, %v624
        %v627 = vunpack.c.l.s4 1983009808
        %v628 = vunpack.c.0.s8 %v627
        %v629 = vperm.slane %v621, %v628
        %v630 = vrot.slane %v585, 4
        %v631 = vsel %vm338, %v630, %v581
        %v632 = vrot.slane %v581, 4
        %v633 = vsel %vm338, %v585, %v632
        %v635 = vunpack.c.l.s4 1983009808
        %v636 = vunpack.c.0.s8 %v635
        %v637 = vperm.slane %v631, %v636
        %v639 = vunpack.c.l.s4 1983009808
        %v640 = vunpack.c.0.s8 %v639
        %v641 = vperm.slane %v633, %v640
        %v642 = vrot.slane %v613, 4
        %v643 = vsel %vm338, %v642, %v601
        %v644 = vrot.slane %v601, 4
        %v645 = vsel %vm338, %v613, %v644
        %v647 = vunpack.c.l.s4 1934713408
        %v648 = vunpack.c.0.s8 %v647
        %v649 = vperm.slane %v643, %v648
        %v651 = vunpack.c.l.s4 1934713408
        %v652 = vunpack.c.0.s8 %v651
        %v653 = vperm.slane %v645, %v652
        %v654 = vrot.slane %v617, 4
        %v655 = vsel %vm338, %v654, %v605
        %v656 = vrot.slane %v605, 4
        %v657 = vsel %vm338, %v617, %v656
        %v659 = vunpack.c.l.s4 1934713408
        %v660 = vunpack.c.0.s8 %v659
        %v661 = vperm.slane %v655, %v660
        %v663 = vunpack.c.l.s4 1934713408
        %v664 = vunpack.c.0.s8 %v663
        %v665 = vperm.slane %v657, %v664
        %v666 = vrot.slane %v637, 4
        %v667 = vsel %vm338, %v666, %v625
        %v668 = vrot.slane %v625, 4
        %v669 = vsel %vm338, %v637, %v668
        %v671 = vunpack.c.l.s4 1934713408
        %v672 = vunpack.c.0.s8 %v671
        %v673 = vperm.slane %v667, %v672
        %v675 = vunpack.c.l.s4 1934713408
        %v676 = vunpack.c.0.s8 %v675
        %v677 = vperm.slane %v669, %v676
        %v678 = vrot.slane %v641, 4
        %v679 = vsel %vm338, %v678, %v629
        %v680 = vrot.slane %v629, 4
        %v681 = vsel %vm338, %v641, %v680
        %v683 = vunpack.c.l.s4 1934713408
        %v684 = vunpack.c.0.s8 %v683
        %v685 = vperm.slane %v679, %v684
        %v687 = vunpack.c.l.s4 1934713408
        %v688 = vunpack.c.0.s8 %v687
        %v689 = vperm.slane %v681, %v688
        %v690 = vrot.slane %v673, 4
        %v691 = vsel %vm338, %v690, %v649
        %v692 = vrot.slane %v649, 4
        %v693 = vsel %vm338, %v673, %v692
        %v694 = vrot.slane %v677, 4
        %v695 = vsel %vm338, %v694, %v653
        %v696 = vrot.slane %v653, 4
        %v697 = vsel %vm338, %v677, %v696
        %v698 = vrot.slane %v685, 4
        %v699 = vsel %vm338, %v698, %v661
        %v700 = vrot.slane %v661, 4
        %v701 = vsel %vm338, %v685, %v700
        %v702 = vrot.slane %v689, 4
        %v703 = vsel %vm338, %v702, %v665
        %v704 = vrot.slane %v665, 4
        %v705 = vsel %vm338, %v689, %v704
        %v706 = vrot.slane %v695, 4
        %v707 = vsel %vm338, %v706, %v691
        %v708 = vrot.slane %v691, 4
        %v709 = vsel %vm338, %v695, %v708
        %v711 = vunpack.c.l.s4 1983009808
        %v712 = vunpack.c.0.s8 %v711
        %v713 = vperm.slane %v707, %v712
        %v715 = vunpack.c.l.s4 1983009808
        %v716 = vunpack.c.0.s8 %v715
        %v717 = vperm.slane %v709, %v716
        %v718 = vrot.slane %v697, 4
        %v719 = vsel %vm338, %v718, %v693
        %v720 = vrot.slane %v693, 4
        %v721 = vsel %vm338, %v697, %v720
        %v723 = vunpack.c.l.s4 1983009808
        %v724 = vunpack.c.0.s8 %v723
        %v725 = vperm.slane %v719, %v724
        %v727 = vunpack.c.l.s4 1983009808
        %v728 = vunpack.c.0.s8 %v727
        %v729 = vperm.slane %v721, %v728
        %v730 = vrot.slane %v703, 4
        %v731 = vsel %vm338, %v730, %v699
        %v732 = vrot.slane %v699, 4
        %v733 = vsel %vm338, %v703, %v732
        %v735 = vunpack.c.l.s4 1983009808
        %v736 = vunpack.c.0.s8 %v735
        %v737 = vperm.slane %v731, %v736
        %v739 = vunpack.c.l.s4 1983009808
        %v740 = vunpack.c.0.s8 %v739
        %v741 = vperm.slane %v733, %v740
        %v742 = vrot.slane %v705, 4
        %v743 = vsel %vm338, %v742, %v701
        %v744 = vrot.slane %v701, 4
        %v745 = vsel %vm338, %v705, %v744
        %v747 = vunpack.c.l.s4 1983009808
        %v748 = vunpack.c.0.s8 %v747
        %v749 = vperm.slane %v743, %v748
        %v751 = vunpack.c.l.s4 1983009808
        %v752 = vunpack.c.0.s8 %v751
        %v753 = vperm.slane %v745, %v752
        %v754 = vrot.slane %v725, 4
        %v755 = vsel %vm338, %v754, %v713
        %v756 = vrot.slane %v713, 4
        %v757 = vsel %vm338, %v725, %v756
        %v759 = vunpack.c.l.s4 1934713408
        %v760 = vunpack.c.0.s8 %v759
        %v761 = vperm.slane %v755, %v760
        %v763 = vunpack.c.l.s4 1934713408
        %v764 = vunpack.c.0.s8 %v763
        %v765 = vperm.slane %v757, %v764
        %v766 = vrot.slane %v729, 4
        %v767 = vsel %vm338, %v766, %v717
        %v768 = vrot.slane %v717, 4
        %v769 = vsel %vm338, %v729, %v768
        %v771 = vunpack.c.l.s4 1934713408
        %v772 = vunpack.c.0.s8 %v771
        %v773 = vperm.slane %v767, %v772
        %v775 = vunpack.c.l.s4 1934713408
        %v776 = vunpack.c.0.s8 %v775
        %v777 = vperm.slane %v769, %v776
        %v778 = vrot.slane %v749, 4
        %v779 = vsel %vm338, %v778, %v737
        %v780 = vrot.slane %v737, 4
        %v781 = vsel %vm338, %v749, %v780
        %v783 = vunpack.c.l.s4 1934713408
        %v784 = vunpack.c.0.s8 %v783
        %v785 = vperm.slane %v779, %v784
        %v787 = vunpack.c.l.s4 1934713408
        %v788 = vunpack.c.0.s8 %v787
        %v789 = vperm.slane %v781, %v788
        %v790 = vrot.slane %v753, 4
        %v791 = vsel %vm338, %v790, %v741
        %v792 = vrot.slane %v741, 4
        %v793 = vsel %vm338, %v753, %v792
        %v795 = vunpack.c.l.s4 1934713408
        %v796 = vunpack.c.0.s8 %v795
        %v797 = vperm.slane %v791, %v796
        %v799 = vunpack.c.l.s4 1934713408
        %v800 = vunpack.c.0.s8 %v799
        %v801 = vperm.slane %v793, %v800
        %v802 = vrot.slane %v785, 4
        %v803 = vsel %vm338, %v802, %v761
        %v804 = vrot.slane %v761, 4
        %v805 = vsel %vm338, %v785, %v804
        %v806 = vrot.slane %v789, 4
        %v807 = vsel %vm338, %v806, %v765
        %v808 = vrot.slane %v765, 4
        %v809 = vsel %vm338, %v789, %v808
        %v810 = vrot.slane %v797, 4
        %v811 = vsel %vm338, %v810, %v773
        %v812 = vrot.slane %v773, 4
        %v813 = vsel %vm338, %v797, %v812
        %v814 = vrot.slane %v801, 4
        %v815 = vsel %vm338, %v814, %v777
        %v816 = vrot.slane %v777, 4
        %v817 = vsel %vm338, %v801, %v816
        %v818 = vpack.c.bf16 %v803, %v803
        %v819 = vpack.c.bf16 %v805, %v805
        %v820 = vpack.c.bf16 %v807, %v807
        %v821 = vpack.c.bf16 %v809, %v809
        %v822 = vpack.c.bf16 %v811, %v811
        %v823 = vpack.c.bf16 %v813, %v813
        %v824 = vpack.c.bf16 %v815, %v815
        %v825 = vpack.c.bf16 %v817, %v817
        %826 = vrot.lane.b32.xlu0 %v312, 64
        %v827 = vpop.permute.xlu0 %826
        %828 = vrot.lane.b32.xlu0 %v317, 64
        %v829 = vpop.permute.xlu0 %828
        %830 = vrot.lane.b32.xlu0 %v320, 64
        %v831 = vpop.permute.xlu0 %830
        %832 = vrot.lane.b32.xlu0 %v323, 64
        %v833 = vpop.permute.xlu0 %832
        %834 = vrot.lane.b32.xlu0 %v326, 64
        %v835 = vpop.permute.xlu0 %834
        %836 = vrot.lane.b32.xlu0 %v329, 64
        %v837 = vpop.permute.xlu0 %836
        %838 = vrot.lane.b32.xlu0 %v332, 64
        %v839 = vpop.permute.xlu0 %838
        %840 = vrot.lane.b32.xlu0 %v335, 64
        %v841 = vpop.permute.xlu0 %840
        %v850 = vrot.slane %v831, 4
        %v851 = vsel %vm338, %v850, %v827
        %v852 = vrot.slane %v827, 4
        %v853 = vsel %vm338, %v831, %v852
        %v855 = vunpack.c.l.s4 1983009808
        %v856 = vunpack.c.0.s8 %v855
        %v857 = vperm.slane %v851, %v856
        %v859 = vunpack.c.l.s4 1983009808
        %v860 = vunpack.c.0.s8 %v859
        %v861 = vperm.slane %v853, %v860
        %v862 = vrot.slane %v833, 4
        %v863 = vsel %vm338, %v862, %v829
        %v864 = vrot.slane %v829, 4
        %v865 = vsel %vm338, %v833, %v864
        %v867 = vunpack.c.l.s4 1983009808
        %v868 = vunpack.c.0.s8 %v867
        %v869 = vperm.slane %v863, %v868
        %v871 = vunpack.c.l.s4 1983009808
        %v872 = vunpack.c.0.s8 %v871
        %v873 = vperm.slane %v865, %v872
        %v874 = vrot.slane %v839, 4
        %v875 = vsel %vm338, %v874, %v835
        %v876 = vrot.slane %v835, 4
        %v877 = vsel %vm338, %v839, %v876
        %v879 = vunpack.c.l.s4 1983009808
        %v880 = vunpack.c.0.s8 %v879
        %v881 = vperm.slane %v875, %v880
        %v883 = vunpack.c.l.s4 1983009808
        %v884 = vunpack.c.0.s8 %v883
        %v885 = vperm.slane %v877, %v884
        %v886 = vrot.slane %v841, 4
        %v887 = vsel %vm338, %v886, %v837
        %v888 = vrot.slane %v837, 4
        %v889 = vsel %vm338, %v841, %v888
        %v891 = vunpack.c.l.s4 1983009808
        %v892 = vunpack.c.0.s8 %v891
        %v893 = vperm.slane %v887, %v892
        %v895 = vunpack.c.l.s4 1983009808
        %v896 = vunpack.c.0.s8 %v895
        %v897 = vperm.slane %v889, %v896
        %v898 = vrot.slane %v869, 4
        %v899 = vsel %vm338, %v898, %v857
        %v900 = vrot.slane %v857, 4
        %v901 = vsel %vm338, %v869, %v900
        %v903 = vunpack.c.l.s4 1934713408
        %v904 = vunpack.c.0.s8 %v903
        %v905 = vperm.slane %v899, %v904
        %v907 = vunpack.c.l.s4 1934713408
        %v908 = vunpack.c.0.s8 %v907
        %v909 = vperm.slane %v901, %v908
        %v910 = vrot.slane %v873, 4
        %v911 = vsel %vm338, %v910, %v861
        %v912 = vrot.slane %v861, 4
        %v913 = vsel %vm338, %v873, %v912
        %v915 = vunpack.c.l.s4 1934713408
        %v916 = vunpack.c.0.s8 %v915
        %v917 = vperm.slane %v911, %v916
        %v919 = vunpack.c.l.s4 1934713408
        %v920 = vunpack.c.0.s8 %v919
        %v921 = vperm.slane %v913, %v920
        %v922 = vrot.slane %v893, 4
        %v923 = vsel %vm338, %v922, %v881
        %v924 = vrot.slane %v881, 4
        %v925 = vsel %vm338, %v893, %v924
        %v927 = vunpack.c.l.s4 1934713408
        %v928 = vunpack.c.0.s8 %v927
        %v929 = vperm.slane %v923, %v928
        %v931 = vunpack.c.l.s4 1934713408
        %v932 = vunpack.c.0.s8 %v931
        %v933 = vperm.slane %v925, %v932
        %v934 = vrot.slane %v897, 4
        %v935 = vsel %vm338, %v934, %v885
        %v936 = vrot.slane %v885, 4
        %v937 = vsel %vm338, %v897, %v936
        %v939 = vunpack.c.l.s4 1934713408
        %v940 = vunpack.c.0.s8 %v939
        %v941 = vperm.slane %v935, %v940
        %v943 = vunpack.c.l.s4 1934713408
        %v944 = vunpack.c.0.s8 %v943
        %v945 = vperm.slane %v937, %v944
        %v946 = vrot.slane %v929, 4
        %v947 = vsel %vm338, %v946, %v905
        %v948 = vrot.slane %v905, 4
        %v949 = vsel %vm338, %v929, %v948
        %v950 = vrot.slane %v933, 4
        %v951 = vsel %vm338, %v950, %v909
        %v952 = vrot.slane %v909, 4
        %v953 = vsel %vm338, %v933, %v952
        %v954 = vrot.slane %v941, 4
        %v955 = vsel %vm338, %v954, %v917
        %v956 = vrot.slane %v917, 4
        %v957 = vsel %vm338, %v941, %v956
        %v958 = vrot.slane %v945, 4
        %v959 = vsel %vm338, %v958, %v921
        %v960 = vrot.slane %v921, 4
        %v961 = vsel %vm338, %v945, %v960
        %v962 = vrot.slane %v951, 4
        %v963 = vsel %vm338, %v962, %v947
        %v964 = vrot.slane %v947, 4
        %v965 = vsel %vm338, %v951, %v964
        %v967 = vunpack.c.l.s4 1983009808
        %v968 = vunpack.c.0.s8 %v967
        %v969 = vperm.slane %v963, %v968
        %v971 = vunpack.c.l.s4 1983009808
        %v972 = vunpack.c.0.s8 %v971
        %v973 = vperm.slane %v965, %v972
        %v974 = vrot.slane %v953, 4
        %v975 = vsel %vm338, %v974, %v949
        %v976 = vrot.slane %v949, 4
        %v977 = vsel %vm338, %v953, %v976
        %v979 = vunpack.c.l.s4 1983009808
        %v980 = vunpack.c.0.s8 %v979
        %v981 = vperm.slane %v975, %v980
        %v983 = vunpack.c.l.s4 1983009808
        %v984 = vunpack.c.0.s8 %v983
        %v985 = vperm.slane %v977, %v984
        %v986 = vrot.slane %v959, 4
        %v987 = vsel %vm338, %v986, %v955
        %v988 = vrot.slane %v955, 4
        %v989 = vsel %vm338, %v959, %v988
        %v991 = vunpack.c.l.s4 1983009808
        %v992 = vunpack.c.0.s8 %v991
        %v993 = vperm.slane %v987, %v992
        %v995 = vunpack.c.l.s4 1983009808
        %v996 = vunpack.c.0.s8 %v995
        %v997 = vperm.slane %v989, %v996
        %v998 = vrot.slane %v961, 4
        %v999 = vsel %vm338, %v998, %v957
        %v1000 = vrot.slane %v957, 4
        %v1001 = vsel %vm338, %v961, %v1000
        %v1003 = vunpack.c.l.s4 1983009808
        %v1004 = vunpack.c.0.s8 %v1003
        %v1005 = vperm.slane %v999, %v1004
        %v1007 = vunpack.c.l.s4 1983009808
        %v1008 = vunpack.c.0.s8 %v1007
        %v1009 = vperm.slane %v1001, %v1008
        %v1010 = vrot.slane %v981, 4
        %v1011 = vsel %vm338, %v1010, %v969
        %v1012 = vrot.slane %v969, 4
        %v1013 = vsel %vm338, %v981, %v1012
        %v1015 = vunpack.c.l.s4 1934713408
        %v1016 = vunpack.c.0.s8 %v1015
        %v1017 = vperm.slane %v1011, %v1016
        %v1019 = vunpack.c.l.s4 1934713408
        %v1020 = vunpack.c.0.s8 %v1019
        %v1021 = vperm.slane %v1013, %v1020
        %v1022 = vrot.slane %v985, 4
        %v1023 = vsel %vm338, %v1022, %v973
        %v1024 = vrot.slane %v973, 4
        %v1025 = vsel %vm338, %v985, %v1024
        %v1027 = vunpack.c.l.s4 1934713408
        %v1028 = vunpack.c.0.s8 %v1027
        %v1029 = vperm.slane %v1023, %v1028
        %v1031 = vunpack.c.l.s4 1934713408
        %v1032 = vunpack.c.0.s8 %v1031
        %v1033 = vperm.slane %v1025, %v1032
        %v1034 = vrot.slane %v1005, 4
        %v1035 = vsel %vm338, %v1034, %v993
        %v1036 = vrot.slane %v993, 4
        %v1037 = vsel %vm338, %v1005, %v1036
        %v1039 = vunpack.c.l.s4 1934713408
        %v1040 = vunpack.c.0.s8 %v1039
        %v1041 = vperm.slane %v1035, %v1040
        %v1043 = vunpack.c.l.s4 1934713408
        %v1044 = vunpack.c.0.s8 %v1043
        %v1045 = vperm.slane %v1037, %v1044
        %v1046 = vrot.slane %v1009, 4
        %v1047 = vsel %vm338, %v1046, %v997
        %v1048 = vrot.slane %v997, 4
        %v1049 = vsel %vm338, %v1009, %v1048
        %v1051 = vunpack.c.l.s4 1934713408
        %v1052 = vunpack.c.0.s8 %v1051
        %v1053 = vperm.slane %v1047, %v1052
        %v1055 = vunpack.c.l.s4 1934713408
        %v1056 = vunpack.c.0.s8 %v1055
        %v1057 = vperm.slane %v1049, %v1056
        %v1058 = vrot.slane %v1041, 4
        %v1059 = vsel %vm338, %v1058, %v1017
        %v1060 = vrot.slane %v1017, 4
        %v1061 = vsel %vm338, %v1041, %v1060
        %v1062 = vrot.slane %v1045, 4
        %v1063 = vsel %vm338, %v1062, %v1021
        %v1064 = vrot.slane %v1021, 4
        %v1065 = vsel %vm338, %v1045, %v1064
        %v1066 = vrot.slane %v1053, 4
        %v1067 = vsel %vm338, %v1066, %v1029
        %v1068 = vrot.slane %v1029, 4
        %v1069 = vsel %vm338, %v1053, %v1068
        %v1070 = vrot.slane %v1057, 4
        %v1071 = vsel %vm338, %v1070, %v1033
        %v1072 = vrot.slane %v1033, 4
        %v1073 = vsel %vm338, %v1057, %v1072
        %v1074 = vpack.c.bf16 %v1059, %v1059
        %v1075 = vpack.c.bf16 %v1061, %v1061
        %v1076 = vpack.c.bf16 %v1063, %v1063
        %v1077 = vpack.c.bf16 %v1065, %v1065
        %v1078 = vpack.c.bf16 %v1067, %v1067
        %v1079 = vpack.c.bf16 %v1069, %v1069
        %v1080 = vpack.c.bf16 %v1071, %v1071
        %v1081 = vpack.c.bf16 %v1073, %v1073
        %vm1082 = vcmask 31744
        %v1084 = vsel %vm1082, %v562, 0
        %v1087 = vsel %vm1082, %v818, 0
        %1089 = vmatpush.bf16.xpose.msra.mxu0 0
        %1090 = vmatpush.bf16.xpose.msra.mxu0 0
        %1091 = vmatpush.bf16.xpose.msra.mxu0 0
        %1092 = vmatpush.bf16.xpose.msra.mxu0 0
        %1093 = vmatpush.bf16.xpose.msra.mxu0 0
        %1094 = vmatpush.bf16.xpose.msra.mxu0 0
        %1095 = vmatpush.bf16.xpose.msra.mxu0 0
        %1096 = vmatpush.bf16.xpose.msra.mxu0 %v1087
        %1097 = vmatmul.bf16.gmra.mxu0 %v1084
        %v1098 = vpop.f32.mrf.mxu0
        %v1099 = vadd.f32 0.0, %v1098
        %v1100 = vpop.f32.mrf.mxu0
        %1101 = vdwg.mxu0
        %v1103 = vsel %vm1082, %v563, 0
        %v1106 = vsel %vm1082, %v819, 0
        %1108 = vmatpush.bf16.xpose.msra.mxu0 0
        %1109 = vmatpush.bf16.xpose.msra.mxu0 0
        %1110 = vmatpush.bf16.xpose.msra.mxu0 0
        %1111 = vmatpush.bf16.xpose.msra.mxu0 0
        %1112 = vmatpush.bf16.xpose.msra.mxu0 0
        %1113 = vmatpush.bf16.xpose.msra.mxu0 0
        %1114 = vmatpush.bf16.xpose.msra.mxu0 0
        %1115 = vmatpush.bf16.xpose.msra.mxu0 %v1106
        %1116 = vmatmul.bf16.gmra.mxu0 %v1103
        %v1117 = vpop.f32.mrf.mxu0
        %v1118 = vadd.f32 0.0, %v1117
        %v1119 = vpop.f32.mrf.mxu0
        %1120 = vdwg.mxu0
        %v1122 = vsel %vm1082, %v564, 0
        %v1125 = vsel %vm1082, %v820, 0
        %1127 = vmatpush.bf16.xpose.msra.mxu0 0
        %1128 = vmatpush.bf16.xpose.msra.mxu0 0
        %1129 = vmatpush.bf16.xpose.msra.mxu0 0
        %1130 = vmatpush.bf16.xpose.msra.mxu0 0
        %1131 = vmatpush.bf16.xpose.msra.mxu0 0
        %1132 = vmatpush.bf16.xpose.msra.mxu0 0
        %1133 = vmatpush.bf16.xpose.msra.mxu0 0
        %1134 = vmatpush.bf16.xpose.msra.mxu0 %v1125
        %1135 = vmatmul.bf16.gmra.mxu0 %v1122
        %v1136 = vpop.f32.mrf.mxu0
        %v1137 = vadd.f32 0.0, %v1136
        %v1138 = vpop.f32.mrf.mxu0
        %1139 = vdwg.mxu0
        %v1141 = vsel %vm1082, %v565, 0
        %v1144 = vsel %vm1082, %v821, 0
        %1146 = vmatpush.bf16.xpose.msra.mxu0 0
        %1147 = vmatpush.bf16.xpose.msra.mxu0 0
        %1148 = vmatpush.bf16.xpose.msra.mxu0 0
        %1149 = vmatpush.bf16.xpose.msra.mxu0 0
        %1150 = vmatpush.bf16.xpose.msra.mxu0 0
        %1151 = vmatpush.bf16.xpose.msra.mxu0 0
        %1152 = vmatpush.bf16.xpose.msra.mxu0 0
        %1153 = vmatpush.bf16.xpose.msra.mxu0 %v1144
        %1154 = vmatmul.bf16.gmra.mxu0 %v1141
        %v1155 = vpop.f32.mrf.mxu0
        %v1156 = vadd.f32 0.0, %v1155
        %v1157 = vpop.f32.mrf.mxu0
        %1158 = vdwg.mxu0
        %v1160 = vsel %vm1082, %v566, 0
        %v1163 = vsel %vm1082, %v822, 0
        %1165 = vmatpush.bf16.xpose.msra.mxu0 0
        %1166 = vmatpush.bf16.xpose.msra.mxu0 0
        %1167 = vmatpush.bf16.xpose.msra.mxu0 0
        %1168 = vmatpush.bf16.xpose.msra.mxu0 0
        %1169 = vmatpush.bf16.xpose.msra.mxu0 0
        %1170 = vmatpush.bf16.xpose.msra.mxu0 0
        %1171 = vmatpush.bf16.xpose.msra.mxu0 0
        %1172 = vmatpush.bf16.xpose.msra.mxu0 %v1163
        %1173 = vmatmul.bf16.gmra.mxu0 %v1160
        %v1174 = vpop.f32.mrf.mxu0
        %v1175 = vadd.f32 0.0, %v1174
        %v1176 = vpop.f32.mrf.mxu0
        %1177 = vdwg.mxu0
        %v1179 = vsel %vm1082, %v567, 0
        %v1182 = vsel %vm1082, %v823, 0
        %1184 = vmatpush.bf16.xpose.msra.mxu0 0
        %1185 = vmatpush.bf16.xpose.msra.mxu0 0
        %1186 = vmatpush.bf16.xpose.msra.mxu0 0
        %1187 = vmatpush.bf16.xpose.msra.mxu0 0
        %1188 = vmatpush.bf16.xpose.msra.mxu0 0
        %1189 = vmatpush.bf16.xpose.msra.mxu0 0
        %1190 = vmatpush.bf16.xpose.msra.mxu0 0
        %1191 = vmatpush.bf16.xpose.msra.mxu0 %v1182
        %1192 = vmatmul.bf16.gmra.mxu0 %v1179
        %v1193 = vpop.f32.mrf.mxu0
        %v1194 = vadd.f32 0.0, %v1193
        %v1195 = vpop.f32.mrf.mxu0
        %1196 = vdwg.mxu0
        %v1198 = vsel %vm1082, %v568, 0
        %v1201 = vsel %vm1082, %v824, 0
        %1203 = vmatpush.bf16.xpose.msra.mxu0 0
        %1204 = vmatpush.bf16.xpose.msra.mxu0 0
        %1205 = vmatpush.bf16.xpose.msra.mxu0 0
        %1206 = vmatpush.bf16.xpose.msra.mxu0 0
        %1207 = vmatpush.bf16.xpose.msra.mxu0 0
        %1208 = vmatpush.bf16.xpose.msra.mxu0 0
        %1209 = vmatpush.bf16.xpose.msra.mxu0 0
        %1210 = vmatpush.bf16.xpose.msra.mxu0 %v1201
        %1211 = vmatmul.bf16.gmra.mxu0 %v1198
        %v1212 = vpop.f32.mrf.mxu0
        %v1213 = vadd.f32 0.0, %v1212
        %v1214 = vpop.f32.mrf.mxu0
        %1215 = vdwg.mxu0
        %v1217 = vsel %vm1082, %v569, 0
        %v1220 = vsel %vm1082, %v825, 0
        %1222 = vmatpush.bf16.xpose.msra.mxu0 0
        %1223 = vmatpush.bf16.xpose.msra.mxu0 0
        %1224 = vmatpush.bf16.xpose.msra.mxu0 0
        %1225 = vmatpush.bf16.xpose.msra.mxu0 0
        %1226 = vmatpush.bf16.xpose.msra.mxu0 0
        %1227 = vmatpush.bf16.xpose.msra.mxu0 0
        %1228 = vmatpush.bf16.xpose.msra.mxu0 0
        %1229 = vmatpush.bf16.xpose.msra.mxu0 %v1220
        %1230 = vmatmul.bf16.gmra.mxu0 %v1217
        %v1231 = vpop.f32.mrf.mxu0
        %v1232 = vadd.f32 0.0, %v1231
        %v1233 = vpop.f32.mrf.mxu0
        %1234 = vdwg.mxu0
        %vm1235 = vcmask 64512
        %v1236 = vsel %vm1235, %v1099, -inf
        %1237 = vmax.xlane.f32.xlu0 %v1236
        %v1238 = vpop.xlane.xlu0 %1237
        %v1239 = vsel %vm1235, %v1118, -inf
        %1240 = vmax.xlane.f32.xlu0 %v1239
        %v1241 = vpop.xlane.xlu0 %1240
        %v1242 = vsel %vm1235, %v1137, -inf
        %1243 = vmax.xlane.f32.xlu0 %v1242
        %v1244 = vpop.xlane.xlu0 %1243
        %v1245 = vsel %vm1235, %v1156, -inf
        %1246 = vmax.xlane.f32.xlu0 %v1245
        %v1247 = vpop.xlane.xlu0 %1246
        %v1248 = vsel %vm1235, %v1175, -inf
        %1249 = vmax.xlane.f32.xlu0 %v1248
        %v1250 = vpop.xlane.xlu0 %1249
        %v1251 = vsel %vm1235, %v1194, -inf
        %1252 = vmax.xlane.f32.xlu0 %v1251
        %v1253 = vpop.xlane.xlu0 %1252
        %v1254 = vsel %vm1235, %v1213, -inf
        %1255 = vmax.xlane.f32.xlu0 %v1254
        %v1256 = vpop.xlane.xlu0 %1255
        %v1257 = vsel %vm1235, %v1232, -inf
        %1258 = vmax.xlane.f32.xlu0 %v1257
        %v1259 = vpop.xlane.xlu0 %1258
        %v1260 = vsub.f32 %v1099, %v1238
        %v1261 = vsub.f32 %v1118, %v1241
        %v1262 = vsub.f32 %v1137, %v1244
        %v1263 = vsub.f32 %v1156, %v1247
        %v1264 = vsub.f32 %v1175, %v1250
        %v1265 = vsub.f32 %v1194, %v1253
        %v1266 = vsub.f32 %v1213, %v1256
        %v1267 = vsub.f32 %v1232, %v1259
        %v1268 = vmul.f32 %v1260, 1.442695
        %v1269 = vpow.pop %v1268
        %v1270 = vmul.f32 %v1261, 1.442695
        %v1271 = vpow.pop %v1270
        %v1272 = vmul.f32 %v1262, 1.442695
        %v1273 = vpow.pop %v1272
        %v1274 = vmul.f32 %v1263, 1.442695
        %v1275 = vpow.pop %v1274
        %v1276 = vmul.f32 %v1264, 1.442695
        %v1277 = vpow.pop %v1276
        %v1278 = vmul.f32 %v1265, 1.442695
        %v1279 = vpow.pop %v1278
        %v1280 = vmul.f32 %v1266, 1.442695
        %v1281 = vpow.pop %v1280
        %v1282 = vmul.f32 %v1267, 1.442695
        %v1283 = vpow.pop %v1282
        %v1284 = vsel %vm1235, %v1269, 0.0
        %1285 = vadd.xlane.f32.xlu0 %v1284
        %v1286 = vpop.xlane.xlu0 %1285
        %v1287 = vsel %vm1235, %v1271, 0.0
        %1288 = vadd.xlane.f32.xlu0 %v1287
        %v1289 = vpop.xlane.xlu0 %1288
        %v1290 = vsel %vm1235, %v1273, 0.0
        %1291 = vadd.xlane.f32.xlu0 %v1290
        %v1292 = vpop.xlane.xlu0 %1291
        %v1293 = vsel %vm1235, %v1275, 0.0
        %1294 = vadd.xlane.f32.xlu0 %v1293
        %v1295 = vpop.xlane.xlu0 %1294
        %v1296 = vsel %vm1235, %v1277, 0.0
        %1297 = vadd.xlane.f32.xlu0 %v1296
        %v1298 = vpop.xlane.xlu0 %1297
        %v1299 = vsel %vm1235, %v1279, 0.0
        %1300 = vadd.xlane.f32.xlu0 %v1299
        %v1301 = vpop.xlane.xlu0 %1300
        %v1302 = vsel %vm1235, %v1281, 0.0
        %1303 = vadd.xlane.f32.xlu0 %v1302
        %v1304 = vpop.xlane.xlu0 %1303
        %v1305 = vsel %vm1235, %v1283, 0.0
        %1306 = vadd.xlane.f32.xlu0 %v1305
        %v1307 = vpop.xlane.xlu0 %1306
        %v1308 = vrcp.pop %v1286
        %v1309 = vmul.f32 %v1286, %v1308
        %v1310 = vsub.f32 1.0, %v1309
        %v1311 = vmul.f32 %v1308, %v1310
        %v1312 = vadd.f32 %v1308, %v1311
        %vm1313 = vweird.f32 %v1286
        %vm1314 = vweird.f32 %v1308
        %vm1315 = vmor %vm1313, %vm1314
        %v1316 = vsel %vm1315, %v1308, %v1312
        %v1317 = vand.u32 2147483647, %v1286
        %vm1318 = vcmp.eq.f32.partialorder %v1317, 8.507059e+37
        %v1319 = vand.u32 %v1286, 2147483648
        %v1320 = vor.u32 1.1754944e-38, %v1319
        %v1321 = vsel %vm1318, %v1320, %v1316
        %v1322 = vmul.f32 %v1269, %v1321
        %v1323 = vrcp.pop %v1289
        %v1324 = vmul.f32 %v1289, %v1323
        %v1325 = vsub.f32 1.0, %v1324
        %v1326 = vmul.f32 %v1323, %v1325
        %v1327 = vadd.f32 %v1323, %v1326
        %vm1328 = vweird.f32 %v1289
        %vm1329 = vweird.f32 %v1323
        %vm1330 = vmor %vm1328, %vm1329
        %v1331 = vsel %vm1330, %v1323, %v1327
        %v1332 = vand.u32 2147483647, %v1289
        %vm1333 = vcmp.eq.f32.partialorder %v1332, 8.507059e+37
        %v1334 = vand.u32 %v1289, 2147483648
        %v1335 = vor.u32 1.1754944e-38, %v1334
        %v1336 = vsel %vm1333, %v1335, %v1331
        %v1337 = vmul.f32 %v1271, %v1336
        %v1338 = vrcp.pop %v1292
        %v1339 = vmul.f32 %v1292, %v1338
        %v1340 = vsub.f32 1.0, %v1339
        %v1341 = vmul.f32 %v1338, %v1340
        %v1342 = vadd.f32 %v1338, %v1341
        %vm1343 = vweird.f32 %v1292
        %vm1344 = vweird.f32 %v1338
        %vm1345 = vmor %vm1343, %vm1344
        %v1346 = vsel %vm1345, %v1338, %v1342
        %v1347 = vand.u32 2147483647, %v1292
        %vm1348 = vcmp.eq.f32.partialorder %v1347, 8.507059e+37
        %v1349 = vand.u32 %v1292, 2147483648
        %v1350 = vor.u32 1.1754944e-38, %v1349
        %v1351 = vsel %vm1348, %v1350, %v1346
        %v1352 = vmul.f32 %v1273, %v1351
        %v1353 = vrcp.pop %v1295
        %v1354 = vmul.f32 %v1295, %v1353
        %v1355 = vsub.f32 1.0, %v1354
        %v1356 = vmul.f32 %v1353, %v1355
        %v1357 = vadd.f32 %v1353, %v1356
        %vm1358 = vweird.f32 %v1295
        %vm1359 = vweird.f32 %v1353
        %vm1360 = vmor %vm1358, %vm1359
        %v1361 = vsel %vm1360, %v1353, %v1357
        %v1362 = vand.u32 2147483647, %v1295
        %vm1363 = vcmp.eq.f32.partialorder %v1362, 8.507059e+37
        %v1364 = vand.u32 %v1295, 2147483648
        %v1365 = vor.u32 1.1754944e-38, %v1364
        %v1366 = vsel %vm1363, %v1365, %v1361
        %v1367 = vmul.f32 %v1275, %v1366
        %v1368 = vrcp.pop %v1298
        %v1369 = vmul.f32 %v1298, %v1368
        %v1370 = vsub.f32 1.0, %v1369
        %v1371 = vmul.f32 %v1368, %v1370
        %v1372 = vadd.f32 %v1368, %v1371
        %vm1373 = vweird.f32 %v1298
        %vm1374 = vweird.f32 %v1368
        %vm1375 = vmor %vm1373, %vm1374
        %v1376 = vsel %vm1375, %v1368, %v1372
        %v1377 = vand.u32 2147483647, %v1298
        %vm1378 = vcmp.eq.f32.partialorder %v1377, 8.507059e+37
        %v1379 = vand.u32 %v1298, 2147483648
        %v1380 = vor.u32 1.1754944e-38, %v1379
        %v1381 = vsel %vm1378, %v1380, %v1376
        %v1382 = vmul.f32 %v1277, %v1381
        %v1383 = vrcp.pop %v1301
        %v1384 = vmul.f32 %v1301, %v1383
        %v1385 = vsub.f32 1.0, %v1384
        %v1386 = vmul.f32 %v1383, %v1385
        %v1387 = vadd.f32 %v1383, %v1386
        %vm1388 = vweird.f32 %v1301
        %vm1389 = vweird.f32 %v1383
        %vm1390 = vmor %vm1388, %vm1389
        %v1391 = vsel %vm1390, %v1383, %v1387
        %v1392 = vand.u32 2147483647, %v1301
        %vm1393 = vcmp.eq.f32.partialorder %v1392, 8.507059e+37
        %v1394 = vand.u32 %v1301, 2147483648
        %v1395 = vor.u32 1.1754944e-38, %v1394
        %v1396 = vsel %vm1393, %v1395, %v1391
        %v1397 = vmul.f32 %v1279, %v1396
        %v1398 = vrcp.pop %v1304
        %v1399 = vmul.f32 %v1304, %v1398
        %v1400 = vsub.f32 1.0, %v1399
        %v1401 = vmul.f32 %v1398, %v1400
        %v1402 = vadd.f32 %v1398, %v1401
        %vm1403 = vweird.f32 %v1304
        %vm1404 = vweird.f32 %v1398
        %vm1405 = vmor %vm1403, %vm1404
        %v1406 = vsel %vm1405, %v1398, %v1402
        %v1407 = vand.u32 2147483647, %v1304
        %vm1408 = vcmp.eq.f32.partialorder %v1407, 8.507059e+37
        %v1409 = vand.u32 %v1304, 2147483648
        %v1410 = vor.u32 1.1754944e-38, %v1409
        %v1411 = vsel %vm1408, %v1410, %v1406
        %v1412 = vmul.f32 %v1281, %v1411
        %v1413 = vrcp.pop %v1307
        %v1414 = vmul.f32 %v1307, %v1413
        %v1415 = vsub.f32 1.0, %v1414
        %v1416 = vmul.f32 %v1413, %v1415
        %v1417 = vadd.f32 %v1413, %v1416
        %vm1418 = vweird.f32 %v1307
        %vm1419 = vweird.f32 %v1413
        %vm1420 = vmor %vm1418, %vm1419
        %v1421 = vsel %vm1420, %v1413, %v1417
        %v1422 = vand.u32 2147483647, %v1307
        %vm1423 = vcmp.eq.f32.partialorder %v1422, 8.507059e+37
        %v1424 = vand.u32 %v1307, 2147483648
        %v1425 = vor.u32 1.1754944e-38, %v1424
        %v1426 = vsel %vm1423, %v1425, %v1421
        %v1427 = vmul.f32 %v1283, %v1426
        %v1428 = vpack.c.bf16 %v1322, %v1322
        %v1429 = vpack.c.bf16 %v1337, %v1337
        %v1430 = vpack.c.bf16 %v1352, %v1352
        %v1431 = vpack.c.bf16 %v1367, %v1367
        %v1432 = vpack.c.bf16 %v1382, %v1382
        %v1433 = vpack.c.bf16 %v1397, %v1397
        %v1434 = vpack.c.bf16 %v1412, %v1412
        %v1435 = vpack.c.bf16 %v1427, %v1427
        %v1437 = vsel %vm1235, %v1428, 0
        %vm1439 = vcmask 1043456
        %v1441 = vsel %vm1439, %v1074, 0
        %1443 = vmatpush.bf16.msra.mxu0 0
        %1444 = vmatpush.bf16.msra.mxu0 0
        %1445 = vmatpush.bf16.msra.mxu0 0
        %1446 = vmatpush.bf16.msra.mxu0 0
        %1447 = vmatpush.bf16.msra.mxu0 0
        %1448 = vmatpush.bf16.msra.mxu0 0
        %1449 = vmatpush.bf16.msra.mxu0 0
        %1450 = vmatpush.bf16.msra.mxu0 %v1441
        %1451 = vmatmul.bf16.gmra.mxu0 %v1437
        %v1452 = vpop.f32.mrf.mxu0
        %v1453 = vadd.f32 0.0, %v1452
        %v1454 = vpop.f32.mrf.mxu0
        %1455 = vdwg.mxu0
        %v1457 = vsel %vm1235, %v1429, 0
        %v1460 = vsel %vm1439, %v1075, 0
        %1462 = vmatpush.bf16.msra.mxu0 0
        %1463 = vmatpush.bf16.msra.mxu0 0
        %1464 = vmatpush.bf16.msra.mxu0 0
        %1465 = vmatpush.bf16.msra.mxu0 0
        %1466 = vmatpush.bf16.msra.mxu0 0
        %1467 = vmatpush.bf16.msra.mxu0 0
        %1468 = vmatpush.bf16.msra.mxu0 0
        %1469 = vmatpush.bf16.msra.mxu0 %v1460
        %1470 = vmatmul.bf16.gmra.mxu0 %v1457
        %v1471 = vpop.f32.mrf.mxu0
        %v1472 = vadd.f32 0.0, %v1471
        %v1473 = vpop.f32.mrf.mxu0
        %1474 = vdwg.mxu0
        %v1476 = vsel %vm1235, %v1430, 0
        %v1479 = vsel %vm1439, %v1076, 0
        %1481 = vmatpush.bf16.msra.mxu0 0
        %1482 = vmatpush.bf16.msra.mxu0 0
        %1483 = vmatpush.bf16.msra.mxu0 0
        %1484 = vmatpush.bf16.msra.mxu0 0
        %1485 = vmatpush.bf16.msra.mxu0 0
        %1486 = vmatpush.bf16.msra.mxu0 0
        %1487 = vmatpush.bf16.msra.mxu0 0
        %1488 = vmatpush.bf16.msra.mxu0 %v1479
        %1489 = vmatmul.bf16.gmra.mxu0 %v1476
        %v1490 = vpop.f32.mrf.mxu0
        %v1491 = vadd.f32 0.0, %v1490
        %v1492 = vpop.f32.mrf.mxu0
        %1493 = vdwg.mxu0
        %v1495 = vsel %vm1235, %v1431, 0
        %v1498 = vsel %vm1439, %v1077, 0
        %1500 = vmatpush.bf16.msra.mxu0 0
        %1501 = vmatpush.bf16.msra.mxu0 0
        %1502 = vmatpush.bf16.msra.mxu0 0
        %1503 = vmatpush.bf16.msra.mxu0 0
        %1504 = vmatpush.bf16.msra.mxu0 0
        %1505 = vmatpush.bf16.msra.mxu0 0
        %1506 = vmatpush.bf16.msra.mxu0 0
        %1507 = vmatpush.bf16.msra.mxu0 %v1498
        %1508 = vmatmul.bf16.gmra.mxu0 %v1495
        %v1509 = vpop.f32.mrf.mxu0
        %v1510 = vadd.f32 0.0, %v1509
        %v1511 = vpop.f32.mrf.mxu0
        %1512 = vdwg.mxu0
        %v1514 = vsel %vm1235, %v1432, 0
        %v1517 = vsel %vm1439, %v1078, 0
        %1519 = vmatpush.bf16.msra.mxu0 0
        %1520 = vmatpush.bf16.msra.mxu0 0
        %1521 = vmatpush.bf16.msra.mxu0 0
        %1522 = vmatpush.bf16.msra.mxu0 0
        %1523 = vmatpush.bf16.msra.mxu0 0
        %1524 = vmatpush.bf16.msra.mxu0 0
        %1525 = vmatpush.bf16.msra.mxu0 0
        %1526 = vmatpush.bf16.msra.mxu0 %v1517
        %1527 = vmatmul.bf16.gmra.mxu0 %v1514
        %v1528 = vpop.f32.mrf.mxu0
        %v1529 = vadd.f32 0.0, %v1528
        %v1530 = vpop.f32.mrf.mxu0
        %1531 = vdwg.mxu0
        %v1533 = vsel %vm1235, %v1433, 0
        %v1536 = vsel %vm1439, %v1079, 0
        %1538 = vmatpush.bf16.msra.mxu0 0
        %1539 = vmatpush.bf16.msra.mxu0 0
        %1540 = vmatpush.bf16.msra.mxu0 0
        %1541 = vmatpush.bf16.msra.mxu0 0
        %1542 = vmatpush.bf16.msra.mxu0 0
        %1543 = vmatpush.bf16.msra.mxu0 0
        %1544 = vmatpush.bf16.msra.mxu0 0
        %1545 = vmatpush.bf16.msra.mxu0 %v1536
        %1546 = vmatmul.bf16.gmra.mxu0 %v1533
        %v1547 = vpop.f32.mrf.mxu0
        %v1548 = vadd.f32 0.0, %v1547
        %v1549 = vpop.f32.mrf.mxu0
        %1550 = vdwg.mxu0
        %v1552 = vsel %vm1235, %v1434, 0
        %v1555 = vsel %vm1439, %v1080, 0
        %1557 = vmatpush.bf16.msra.mxu0 0
        %1558 = vmatpush.bf16.msra.mxu0 0
        %1559 = vmatpush.bf16.msra.mxu0 0
        %1560 = vmatpush.bf16.msra.mxu0 0
        %1561 = vmatpush.bf16.msra.mxu0 0
        %1562 = vmatpush.bf16.msra.mxu0 0
        %1563 = vmatpush.bf16.msra.mxu0 0
        %1564 = vmatpush.bf16.msra.mxu0 %v1555
        %1565 = vmatmul.bf16.gmra.mxu0 %v1552
        %v1566 = vpop.f32.mrf.mxu0
        %v1567 = vadd.f32 0.0, %v1566
        %v1568 = vpop.f32.mrf.mxu0
        %1569 = vdwg.mxu0
        %v1571 = vsel %vm1235, %v1435, 0
        %v1574 = vsel %vm1439, %v1081, 0
        %1576 = vmatpush.bf16.msra.mxu0 0
        %1577 = vmatpush.bf16.msra.mxu0 0
        %1578 = vmatpush.bf16.msra.mxu0 0
        %1579 = vmatpush.bf16.msra.mxu0 0
        %1580 = vmatpush.bf16.msra.mxu0 0
        %1581 = vmatpush.bf16.msra.mxu0 0
        %1582 = vmatpush.bf16.msra.mxu0 0
        %1583 = vmatpush.bf16.msra.mxu0 %v1574
        %1584 = vmatmul.bf16.gmra.mxu0 %v1571
        %v1585 = vpop.f32.mrf.mxu0
        %v1586 = vadd.f32 0.0, %v1585
        %v1587 = vpop.f32.mrf.mxu0
        %1588 = vdwg.mxu0
        %v1589 = vrot.slane %v1491, 4
        %v1590 = vsel %vm338, %v1589, %v1453
        %v1591 = vrot.slane %v1453, 4
        %v1592 = vsel %vm338, %v1491, %v1591
        %v1594 = vunpack.c.l.s4 1983009808
        %v1595 = vunpack.c.0.s8 %v1594
        %v1596 = vperm.slane %v1590, %v1595
        %v1598 = vunpack.c.l.s4 1983009808
        %v1599 = vunpack.c.0.s8 %v1598
        %v1600 = vperm.slane %v1592, %v1599
        %v1601 = vrot.slane %v1510, 4
        %v1602 = vsel %vm338, %v1601, %v1472
        %v1603 = vrot.slane %v1472, 4
        %v1604 = vsel %vm338, %v1510, %v1603
        %v1606 = vunpack.c.l.s4 1983009808
        %v1607 = vunpack.c.0.s8 %v1606
        %v1608 = vperm.slane %v1602, %v1607
        %v1610 = vunpack.c.l.s4 1983009808
        %v1611 = vunpack.c.0.s8 %v1610
        %v1612 = vperm.slane %v1604, %v1611
        %v1613 = vrot.slane %v1567, 4
        %v1614 = vsel %vm338, %v1613, %v1529
        %v1615 = vrot.slane %v1529, 4
        %v1616 = vsel %vm338, %v1567, %v1615
        %v1618 = vunpack.c.l.s4 1983009808
        %v1619 = vunpack.c.0.s8 %v1618
        %v1620 = vperm.slane %v1614, %v1619
        %v1622 = vunpack.c.l.s4 1983009808
        %v1623 = vunpack.c.0.s8 %v1622
        %v1624 = vperm.slane %v1616, %v1623
        %v1625 = vrot.slane %v1586, 4
        %v1626 = vsel %vm338, %v1625, %v1548
        %v1627 = vrot.slane %v1548, 4
        %v1628 = vsel %vm338, %v1586, %v1627
        %v1630 = vunpack.c.l.s4 1983009808
        %v1631 = vunpack.c.0.s8 %v1630
        %v1632 = vperm.slane %v1626, %v1631
        %v1634 = vunpack.c.l.s4 1983009808
        %v1635 = vunpack.c.0.s8 %v1634
        %v1636 = vperm.slane %v1628, %v1635
        %v1637 = vrot.slane %v1608, 4
        %v1638 = vsel %vm338, %v1637, %v1596
        %v1639 = vrot.slane %v1596, 4
        %v1640 = vsel %vm338, %v1608, %v1639
        %v1642 = vunpack.c.l.s4 1934713408
        %v1643 = vunpack.c.0.s8 %v1642
        %v1644 = vperm.slane %v1638, %v1643
        %v1646 = vunpack.c.l.s4 1934713408
        %v1647 = vunpack.c.0.s8 %v1646
        %v1648 = vperm.slane %v1640, %v1647
        %v1649 = vrot.slane %v1612, 4
        %v1650 = vsel %vm338, %v1649, %v1600
        %v1651 = vrot.slane %v1600, 4
        %v1652 = vsel %vm338, %v1612, %v1651
        %v1654 = vunpack.c.l.s4 1934713408
        %v1655 = vunpack.c.0.s8 %v1654
        %v1656 = vperm.slane %v1650, %v1655
        %v1658 = vunpack.c.l.s4 1934713408
        %v1659 = vunpack.c.0.s8 %v1658
        %v1660 = vperm.slane %v1652, %v1659
        %v1661 = vrot.slane %v1632, 4
        %v1662 = vsel %vm338, %v1661, %v1620
        %v1663 = vrot.slane %v1620, 4
        %v1664 = vsel %vm338, %v1632, %v1663
        %v1666 = vunpack.c.l.s4 1934713408
        %v1667 = vunpack.c.0.s8 %v1666
        %v1668 = vperm.slane %v1662, %v1667
        %v1670 = vunpack.c.l.s4 1934713408
        %v1671 = vunpack.c.0.s8 %v1670
        %v1672 = vperm.slane %v1664, %v1671
        %v1673 = vrot.slane %v1636, 4
        %v1674 = vsel %vm338, %v1673, %v1624
        %v1675 = vrot.slane %v1624, 4
        %v1676 = vsel %vm338, %v1636, %v1675
        %v1678 = vunpack.c.l.s4 1934713408
        %v1679 = vunpack.c.0.s8 %v1678
        %v1680 = vperm.slane %v1674, %v1679
        %v1682 = vunpack.c.l.s4 1934713408
        %v1683 = vunpack.c.0.s8 %v1682
        %v1684 = vperm.slane %v1676, %v1683
        %v1685 = vrot.slane %v1668, 4
        %v1686 = vsel %vm338, %v1685, %v1644
        %v1687 = vrot.slane %v1644, 4
        %v1688 = vsel %vm338, %v1668, %v1687
        %v1689 = vrot.slane %v1672, 4
        %v1690 = vsel %vm338, %v1689, %v1648
        %v1691 = vrot.slane %v1648, 4
        %v1692 = vsel %vm338, %v1672, %v1691
        %v1693 = vrot.slane %v1680, 4
        %v1694 = vsel %vm338, %v1693, %v1656
        %v1695 = vrot.slane %v1656, 4
        %v1696 = vsel %vm338, %v1680, %v1695
        %v1697 = vrot.slane %v1684, 4
        %v1698 = vsel %vm338, %v1697, %v1660
        %v1699 = vrot.slane %v1660, 4
        %v1700 = vsel %vm338, %v1684, %v1699
        %v1701 = vrot.slane %v1690, 4
        %v1702 = vsel %vm338, %v1701, %v1686
        %v1703 = vrot.slane %v1686, 4
        %v1704 = vsel %vm338, %v1690, %v1703
        %v1706 = vunpack.c.l.s4 1983009808
        %v1707 = vunpack.c.0.s8 %v1706
        %v1708 = vperm.slane %v1702, %v1707
        %v1710 = vunpack.c.l.s4 1983009808
        %v1711 = vunpack.c.0.s8 %v1710
        %v1712 = vperm.slane %v1704, %v1711
        %v1713 = vrot.slane %v1692, 4
        %v1714 = vsel %vm338, %v1713, %v1688
        %v1715 = vrot.slane %v1688, 4
        %v1716 = vsel %vm338, %v1692, %v1715
        %v1718 = vunpack.c.l.s4 1983009808
        %v1719 = vunpack.c.0.s8 %v1718
        %v1720 = vperm.slane %v1714, %v1719
        %v1722 = vunpack.c.l.s4 1983009808
        %v1723 = vunpack.c.0.s8 %v1722
        %v1724 = vperm.slane %v1716, %v1723
        %v1725 = vrot.slane %v1698, 4
        %v1726 = vsel %vm338, %v1725, %v1694
        %v1727 = vrot.slane %v1694, 4
        %v1728 = vsel %vm338, %v1698, %v1727
        %v1730 = vunpack.c.l.s4 1983009808
        %v1731 = vunpack.c.0.s8 %v1730
        %v1732 = vperm.slane %v1726, %v1731
        %v1734 = vunpack.c.l.s4 1983009808
        %v1735 = vunpack.c.0.s8 %v1734
        %v1736 = vperm.slane %v1728, %v1735
        %v1737 = vrot.slane %v1700, 4
        %v1738 = vsel %vm338, %v1737, %v1696
        %v1739 = vrot.slane %v1696, 4
        %v1740 = vsel %vm338, %v1700, %v1739
        %v1742 = vunpack.c.l.s4 1983009808
        %v1743 = vunpack.c.0.s8 %v1742
        %v1744 = vperm.slane %v1738, %v1743
        %v1746 = vunpack.c.l.s4 1983009808
        %v1747 = vunpack.c.0.s8 %v1746
        %v1748 = vperm.slane %v1740, %v1747
        %v1749 = vrot.slane %v1720, 4
        %v1750 = vsel %vm338, %v1749, %v1708
        %v1751 = vrot.slane %v1708, 4
        %v1752 = vsel %vm338, %v1720, %v1751
        %v1754 = vunpack.c.l.s4 1934713408
        %v1755 = vunpack.c.0.s8 %v1754
        %v1756 = vperm.slane %v1750, %v1755
        %v1758 = vunpack.c.l.s4 1934713408
        %v1759 = vunpack.c.0.s8 %v1758
        %v1760 = vperm.slane %v1752, %v1759
        %v1761 = vrot.slane %v1724, 4
        %v1762 = vsel %vm338, %v1761, %v1712
        %v1763 = vrot.slane %v1712, 4
        %v1764 = vsel %vm338, %v1724, %v1763
        %v1766 = vunpack.c.l.s4 1934713408
        %v1767 = vunpack.c.0.s8 %v1766
        %v1768 = vperm.slane %v1762, %v1767
        %v1770 = vunpack.c.l.s4 1934713408
        %v1771 = vunpack.c.0.s8 %v1770
        %v1772 = vperm.slane %v1764, %v1771
        %v1773 = vrot.slane %v1744, 4
        %v1774 = vsel %vm338, %v1773, %v1732
        %v1775 = vrot.slane %v1732, 4
        %v1776 = vsel %vm338, %v1744, %v1775
        %v1778 = vunpack.c.l.s4 1934713408
        %v1779 = vunpack.c.0.s8 %v1778
        %v1780 = vperm.slane %v1774, %v1779
        %v1782 = vunpack.c.l.s4 1934713408
        %v1783 = vunpack.c.0.s8 %v1782
        %v1784 = vperm.slane %v1776, %v1783
        %v1785 = vrot.slane %v1748, 4
        %v1786 = vsel %vm338, %v1785, %v1736
        %v1787 = vrot.slane %v1736, 4
        %v1788 = vsel %vm338, %v1748, %v1787
        %v1790 = vunpack.c.l.s4 1934713408
        %v1791 = vunpack.c.0.s8 %v1790
        %v1792 = vperm.slane %v1786, %v1791
        %v1794 = vunpack.c.l.s4 1934713408
        %v1795 = vunpack.c.0.s8 %v1794
        %v1796 = vperm.slane %v1788, %v1795
        %v1797 = vrot.slane %v1780, 4
        %v1798 = vsel %vm338, %v1797, %v1756
        %v1799 = vrot.slane %v1756, 4
        %v1800 = vsel %vm338, %v1780, %v1799
        %v1801 = vrot.slane %v1784, 4
        %v1802 = vsel %vm338, %v1801, %v1760
        %v1803 = vrot.slane %v1760, 4
        %v1804 = vsel %vm338, %v1784, %v1803
        %v1805 = vrot.slane %v1792, 4
        %v1806 = vsel %vm338, %v1805, %v1768
        %v1807 = vrot.slane %v1768, 4
        %v1808 = vsel %vm338, %v1792, %v1807
        %v1809 = vrot.slane %v1796, 4
        %v1810 = vsel %vm338, %v1809, %v1772
        %v1811 = vrot.slane %v1772, 4
        %v1812 = vsel %vm338, %v1796, %v1811
        %1814 = vrot.lane.b32.xlu0 %v1800, 4
        %v1815 = vpop.permute.xlu0 %1814
        %1818 = vrot.lane.b32.xlu0 %v1802, 8
        %v1819 = vpop.permute.xlu0 %1818
        %1822 = vrot.lane.b32.xlu0 %v1804, 12
        %v1823 = vpop.permute.xlu0 %1822
        %1826 = vrot.lane.b32.xlu0 %v1806, 16
        %v1827 = vpop.permute.xlu0 %1826
        %1830 = vrot.lane.b32.xlu0 %v1808, 20
        %v1831 = vpop.permute.xlu0 %1830
        %1834 = vrot.lane.b32.xlu0 %v1810, 24
        %v1835 = vpop.permute.xlu0 %1834
        %1838 = vrot.lane.b32.xlu0 %v1812, 28
        %v1839 = vpop.permute.xlu0 %1838
        %v1841 = vsel %vm1082, %v1798, %v1815
        %v1842 = vsel %vm1235, %v1841, %v1819
        %vm1843 = vcmask 97280
        %v1844 = vsel %vm1843, %v1842, %v1823
        %vm1845 = vcmask 130048
        %v1846 = vsel %vm1845, %v1844, %v1827
        %vm1847 = vcmask 162816
        %v1848 = vsel %vm1847, %v1846, %v1831
        %vm1849 = vcmask 195584
        %v1850 = vsel %vm1849, %v1848, %v1835
        %vm1851 = vcmask 228352
        %v1852 = vsel %vm1851, %v1850, %v1839
        %v1853 = vpack.c.bf16 %v1852, %v1852
        %v1854 = vld [vmem:[#allocation7] sm:$0xf]
        %v1855 = vld [vmem:[#allocation7 + $0x4] sm:$0xf]
        %v1856 = vld [vmem:[#allocation7 + $0x8] sm:$0xf]
        %v1857 = vld [vmem:[#allocation7 + $0xc] sm:$0xf]
        %v1858 = vld [vmem:[%s4] sm:$0x1]
        %v1860 = vperm.slane %v1858, 0
        %v1866 = vunpack.c.l.b16 %v1854
        %v1867 = vunpack.c.l.b16 %v1855
        %v1868 = vunpack.c.l.b16 %v1856
        %v1869 = vunpack.c.l.b16 %v1857
        %v1870 = vpack.c.b16 %v1867, %v1866
        %v1871 = vpack.c.b16 %v1869, %v1868
        %v1875 = vsel %vm298, %v1853, 0
        %1877 = vmatpush.bf16.msra.mxu0 0
        %1878 = vmatpush.bf16.msra.mxu0 0
        %1879 = vmatpush.bf16.msra.mxu0 0
        %1880 = vmatpush.bf16.msra.mxu0 0
        %1881 = vmatpush.bf16.msra.mxu0 0
        %1882 = vmatpush.bf16.msra.mxu0 0
        %1883 = vmatpush.bf16.msra.mxu0 %v1871
        %1884 = vmatpush.bf16.msra.mxu0 %v1870
        %1885 = vmatmul.bf16.gmra.mxu0 %v1875
        %v1886 = vpop.f32.mrf.mxu0
        %v1887 = vadd.f32 %v1860, %v1886
        %v1888 = vpop.f32.mrf.mxu0
        %1889 = vdwg.mxu0
        %1890 = vst.msk [vmem:[%s274] sm:$0xff] %vm298, %v1887
        %s1891 = sand.u32 %s141, 1
        %s1892 = scalar_lea.sflag [#allocation4], %s1891
        %s1893 = sand.u32 %s141, 1
        %s1894 = smul.addr %s1893, 8
        %s1895 = scalar_lea.vmem [#allocation8], %s1894
        // Predicated region
        $region53: #{tpu_custom_call.1} parent=39 // pred_check
          %p1896 = pneg %p151
        $region54: #{tpu_custom_call.1} parent=39 // pred_check_branch
          %1898 = sbr.rel (%p1896) target = $region56
        $region55: #{tpu_custom_call.1} parent=39 // pred_region
          %1900 = vsyncadd %s1892, 0
          %s1901 = smul.addr %s23, 8
          %s1902 = scalar_lea.hbm %s5, %s1901
          %s1904 = sshll.u32 %s1895, 4
          %s1905 = int_to_ptr.vmem [resolvable:$true] %s1904
          %s1906 = sshll.u32 %s1902, 4
          %s1907 = int_to_ptr.hbm [resolvable:$true] %s1906
          %1909 = dma.vmem_to_hbm [thread:$0]  %s1905, 128, %s1907, %s1892
        $region56: #{tpu_custom_call.1} parent=39 // pred_fallthru
          _
      $region40: #{tpu_custom_call.1} parent=5 // pred_fallthru
        _
      %p1910 = scmp.le.s32.totalorder 2, %s18
      // Predicated region
      $region57: #{tpu_custom_call.1} parent=5 // pred_check
        %p1911 = pneg %p1910
      $region58: #{tpu_custom_call.1} parent=5 // pred_check_branch
        %1913 = sbr.rel (%p1911) target = $region60
      $region59: #{tpu_custom_call.1} parent=5 // pred_region
        %s1914 = ssub.s32 %s18, 2
        // Predicated region
        $region61: #{tpu_custom_call.1} parent=59 // pred_check
          %p1915 = pneg %p157
        $region62: #{tpu_custom_call.1} parent=59 // pred_check_branch
          %1917 = sbr.rel (%p1915) target = $region64
        $region63: #{tpu_custom_call.1} parent=59 // pred_region
          %s1918 = sand.u32 %s142, 1
          %s1919 = scalar_lea.sflag [#allocation4], %s1918
          %s1920 = sand.u32 %s142, 1
          %s1921 = smul.addr %s1920, 8
          %s1922 = scalar_lea.vmem [#allocation8], %s1921
          %1924 = dma.done %s1919, 128
        $region64: #{tpu_custom_call.1} parent=59 // pred_fallthru
          _
      $region60: #{tpu_custom_call.1} parent=5 // pred_fallthru
        _
    $region6: #{tpu_custom_call.1} parent=1 // loop_footer
      %s22 = sadd.s32 1, %s18
    $region7: #{tpu_custom_call.1} parent=1 // loop_footer_branch
      %17 = sbr.rel target = $region3
    $region8: #{tpu_custom_call.1} parent=1 // loop_exit
      _
    %1925 = vsyncpa [#allocation3], 1
    %s1926 = scalar_lea.sflag [#allocation3], 1
    %1927 = vsyncpa %s1926, 1
    %1928 = vsyncpa [#allocation6], 1
    %1929 = vsyncpa [#allocation4], 1
    %s1930 = scalar_lea.sflag [#allocation4], 1
    %1931 = vsyncpa %s1930, 1

</llo_original>
